<compile_context>
chip_gen: v7x
topology: tpu7x:2x2x1
jax: 0.10.0
libtpu: 0.0.40
codegen_flags: <defaults>
</compile_context>

<pallas_src>
import functools
import math

import jax
import jax.numpy as jnp
from jax import lax
from jax.experimental import pallas as pl
from jax.experimental.pallas import tpu as pltpu


def mha_kernel(q_ref, k_ref, v_ref, wqkv_ref, bqkv_ref, wf_ref, bf_ref,
               out_ref, attn_ref, *, h, d_k):
    # q_ref: (1, TQ, E); k_ref/v_ref: (1, S, E); wqkv_ref: (3, h, E, d_k);
    # bqkv_ref: (3, h, 1, d_k); wf_ref: (h, d_k, E); bf_ref: (1, E).
    q_in = q_ref[0]          # (TQ, E)
    k_in = k_ref[0]          # (S, E)
    v_in = v_ref[0]          # (S, E)

    tq = q_in.shape[0]
    s = k_in.shape[0]
    e_dim = h * d_k

    out_acc = jnp.zeros((tq, e_dim), jnp.float32)
    attn_acc = jnp.zeros((tq, s), jnp.float32)

    # TODO(synk): optional attention mask (masked_fill with -1e9) not implemented;
    # the module's 'classic' path as exercised here always passes mask=None.
    # Head loop is statically unrolled (small h) -> plain 2-D MXU dots, full LLO
    # scheduling visibility, no in-kernel reshapes or transposes.
    for head in range(h):
        # Per-head projections (1/sqrt(d_k) already folded into the query slab).
        qh = jnp.dot(q_in, wqkv_ref[0, head],
                     preferred_element_type=jnp.float32) + bqkv_ref[0, head]
        kh = jnp.dot(k_in, wqkv_ref[1, head],
                     preferred_element_type=jnp.float32) + bqkv_ref[1, head]
        vh = jnp.dot(v_in, wqkv_ref[2, head],
                     preferred_element_type=jnp.float32) + bqkv_ref[2, head]

        # scores = qh @ kh^T without materializing a transpose (contract last dims).
        scores = lax.dot_general(qh, kh,
                                 (((1,), (1,)), ((), ())),
                                 preferred_element_type=jnp.float32)   # (TQ, S)

        # Numerically-stable softmax over keys; EUP reciprocal-multiply, no divide.
        m = jnp.max(scores, axis=-1, keepdims=True)
        ex = jnp.exp(scores - m)
        p = ex * pl.reciprocal(jnp.sum(ex, axis=-1, keepdims=True), approx=True)
        attn_acc = attn_acc + p

        ctx = jnp.dot(p, vh, preferred_element_type=jnp.float32)       # (TQ, d_k)
        # Fold this head's slice of lin_fin directly into the output accumulator
        # (equivalent to concatenating head contexts and applying W_fin once).
        out_acc = out_acc + jnp.dot(ctx, wf_ref[head],
                                    preferred_element_type=jnp.float32)

    out_ref[0] = out_acc + bf_ref[...]
    attn_ref[0] = attn_acc


def multi_headed_attention(q, k, v, params, h):
    B, S, E = q.shape
    d_k = E // h
    wq, bq, wk, bk, wv, bv, wf, bf = params
    inv_sqrt_dk = 1.0 / math.sqrt(d_k)

    # Host-side re-layout of the linear layers into per-head slabs; stacking the three
    # input projections gives a single weight DMA stream into the kernel. The score
    # scale is folded into the query weight/bias so the kernel does no extra VPU mul.
    def split_heads_in(w):                      # (E, E) -> (h, E, d_k)
        return w.reshape(E, h, d_k).transpose(1, 0, 2)

    wqkv = jnp.stack([split_heads_in(wq) * inv_sqrt_dk,
                      split_heads_in(wk),
                      split_heads_in(wv)], axis=0)              # (3, h, E, d_k)
    bqkv = jnp.stack([bq.reshape(h, 1, d_k) * inv_sqrt_dk,
                      bk.reshape(h, 1, d_k),
                      bv.reshape(h, 1, d_k)], axis=0)           # (3, h, 1, d_k)
    wf_h = wf.reshape(h, d_k, E)                                # (h, d_k, E)
    bf2 = bf.reshape(1, E)

    # Query-tile size: bounds the live (TQ, S) softmax temporaries for long sequences;
    # tiny sequences use the full extent (block dims equal to array dims are allowed).
    tq = min(S, 256)
    if S % tq != 0:
        tq = S
    n_q = S // tq

    kernel = functools.partial(mha_kernel, h=h, d_k=d_k)

    out, attn = pl.pallas_call(
        kernel,
        out_shape=(jax.ShapeDtypeStruct((B, S, E), jnp.float32),
                   jax.ShapeDtypeStruct((B, S, S), jnp.float32)),
        grid=(B, n_q),
        in_specs=[
            pl.BlockSpec((1, tq, E), lambda b, qi: (b, qi, 0)),        # query tile
            pl.BlockSpec((1, S, E), lambda b, qi: (b, 0, 0)),          # full keys
            pl.BlockSpec((1, S, E), lambda b, qi: (b, 0, 0)),          # full values
            pl.BlockSpec((3, h, E, d_k), lambda b, qi: (0, 0, 0, 0)),  # stacked W_q|k|v
            pl.BlockSpec((3, h, 1, d_k), lambda b, qi: (0, 0, 0, 0)),  # stacked biases
            pl.BlockSpec((h, d_k, E), lambda b, qi: (0, 0, 0)),        # W_fin per head
            pl.BlockSpec((1, E), lambda b, qi: (0, 0)),                # b_fin
        ],
        out_specs=(pl.BlockSpec((1, tq, E), lambda b, qi: (b, qi, 0)),
                   pl.BlockSpec((1, tq, S), lambda b, qi: (b, qi, 0))),
        compiler_params=pltpu.CompilerParams(
            dimension_semantics=("parallel", "parallel")),
    )(q, k, v, wqkv, bqkv, wf_h, bf2)
    return out, attn


def reference_mha(q, k, v, params, h):
    """Pure-JAX reference mirroring the PyTorch forward (eval mode)."""
    B, S, E = q.shape
    d_k = E // h
    wq, bq, wk, bk, wv, bv, wf, bf = params

    with jax.default_matmul_precision("highest"):
        def proj(x, w, b):
            y = x @ w + b                                            # (B, S, E)
            return y.reshape(B, S, h, d_k).transpose(0, 2, 1, 3)     # (B, h, S, d_k)

        Q, K, V = proj(q, wq, bq), proj(k, wk, bk), proj(v, wv, bv)
        scores = jnp.einsum('bhqd,bhkd->bhqk', Q, K) / math.sqrt(d_k)
        p = jax.nn.softmax(scores, axis=-1)
        ctx = jnp.einsum('bhqk,bhkd->bhqd', p, V)
        x = ctx.transpose(0, 2, 1, 3).reshape(B, S, E)
        return x @ wf + bf, p.sum(axis=1)


if __name__ == "__main__":
    B, S, E, h = 2, 8, 32, 4

    key = jax.random.PRNGKey(0)
    keys = jax.random.split(key, 12)
    scale = 1.0 / math.sqrt(E)

    q = jax.random.normal(keys[0], (B, S, E), jnp.float32)
    k = jax.random.normal(keys[1], (B, S, E), jnp.float32)
    v = jax.random.normal(keys[2], (B, S, E), jnp.float32)

    # Deterministic synthetic parameters (shapes of nn.Linear(E, E) x4, weights
    # stored pre-transposed so they apply as x @ W + b).
    params = (
        jax.random.normal(keys[3], (E, E), jnp.float32) * scale,   # W_query
        jax.random.normal(keys[4], (E,), jnp.float32) * scale,     # b_query
        jax.random.normal(keys[5], (E, E), jnp.float32) * scale,   # W_key
        jax.random.normal(keys[6], (E,), jnp.float32) * scale,     # b_key
        jax.random.normal(keys[7], (E, E), jnp.float32) * scale,   # W_value
        jax.random.normal(keys[8], (E,), jnp.float32) * scale,     # b_value
        jax.random.normal(keys[9], (E, E), jnp.float32) * scale,   # W_fin
        jax.random.normal(keys[10], (E,), jnp.float32) * scale,    # b_fin
    )

    out, attn = multi_headed_attention(q, k, v, params, h)
    jax.block_until_ready((out, attn))

    out_ref, attn_ref = reference_mha(q, k, v, params, h)
    # Modest tolerance to absorb MXU pass-count and approx-reciprocal differences
    # between the in-kernel math and the XLA reference matmuls.
    assert jnp.allclose(out, out_ref, atol=1e-2, rtol=1e-2)
    assert jnp.allclose(attn, attn_ref, atol=1e-2, rtol=1e-2)

    print("KERNEL_OK")
</pallas_src>

<mosaic_0001>
module attributes {stable_mosaic.version = 11 : i64} {
  func.func @mha_kernel(%arg0: i32, %arg1: i32, %arg2: memref<1x8x32xf32, #tpu.memory_space<vmem>>, %arg3: memref<1x8x32xf32, #tpu.memory_space<vmem>>, %arg4: memref<1x8x32xf32, #tpu.memory_space<vmem>>, %arg5: memref<3x4x32x8xf32, #tpu.memory_space<vmem>>, %arg6: memref<3x4x1x8xf32, #tpu.memory_space<vmem>>, %arg7: memref<4x8x32xf32, #tpu.memory_space<vmem>>, %arg8: memref<1x32xf32, #tpu.memory_space<vmem>>, %arg9: memref<1x8x32xf32, #tpu.memory_space<vmem>>, %arg10: memref<1x8x8xf32, #tpu.memory_space<vmem>>) attributes {dimension_semantics = [#tpu.dimension_semantics<parallel>, #tpu.dimension_semantics<parallel>], iteration_bounds = array<i64: 2, 1>, scalar_prefetch = 0 : i64, scratch_operands = 0 : i64, tpu.core_type = #tpu.core_type<tc>, window_params = [{transform_indices = @transform_0, window_bounds = array<i64: 1, 8, 32>}, {transform_indices = @transform_1, window_bounds = array<i64: 1, 8, 32>}, {transform_indices = @transform_2, window_bounds = array<i64: 1, 8, 32>}, {pipeline_mode = #tpu.pipeline_mode<synchronous>, transform_indices = @transform_3, window_bounds = array<i64: 3, 4, 32, 8>}, {pipeline_mode = #tpu.pipeline_mode<synchronous>, transform_indices = @transform_4, window_bounds = array<i64: 3, 4, 1, 8>}, {pipeline_mode = #tpu.pipeline_mode<synchronous>, transform_indices = @transform_5, window_bounds = array<i64: 4, 8, 32>}, {pipeline_mode = #tpu.pipeline_mode<synchronous>, transform_indices = @transform_6, window_bounds = array<i64: 1, 32>}, {transform_indices = @transform_7, window_bounds = array<i64: 1, 8, 32>}, {transform_indices = @transform_8, window_bounds = array<i64: 1, 8, 8>}]} {
    %c0 = arith.constant 0 : index
    %c0_0 = arith.constant 0 : index
    %c0_1 = arith.constant 0 : index
    %0 = vector.load %arg2[%c0, %c0_0, %c0_1] : memref<1x8x32xf32, #tpu.memory_space<vmem>>, vector<1x8x32xf32>
    %1 = vector.shape_cast %0 : vector<1x8x32xf32> to vector<8x32xf32>
    %c0_2 = arith.constant 0 : index
    %c0_3 = arith.constant 0 : index
    %c0_4 = arith.constant 0 : index
    %2 = vector.load %arg3[%c0_2, %c0_3, %c0_4] : memref<1x8x32xf32, #tpu.memory_space<vmem>>, vector<1x8x32xf32>
    %3 = vector.shape_cast %2 : vector<1x8x32xf32> to vector<8x32xf32>
    %c0_5 = arith.constant 0 : index
    %c0_6 = arith.constant 0 : index
    %c0_7 = arith.constant 0 : index
    %4 = vector.load %arg4[%c0_5, %c0_6, %c0_7] : memref<1x8x32xf32, #tpu.memory_space<vmem>>, vector<1x8x32xf32>
    %5 = vector.shape_cast %4 : vector<1x8x32xf32> to vector<8x32xf32>
    %cst = arith.constant 0.000000e+00 : f32
    %6 = vector.broadcast %cst : f32 to vector<8x32xf32>
    %cst_8 = arith.constant 0.000000e+00 : f32
    %7 = vector.broadcast %cst_8 : f32 to vector<8x8xf32>
    %c0_9 = arith.constant 0 : index
    %c0_10 = arith.constant 0 : index
    %c0_11 = arith.constant 0 : index
    %c0_12 = arith.constant 0 : index
    %8 = vector.load %arg5[%c0_9, %c0_10, %c0_11, %c0_12] : memref<3x4x32x8xf32, #tpu.memory_space<vmem>>, vector<1x1x32x8xf32>
    %9 = vector.shape_cast %8 : vector<1x1x32x8xf32> to vector<32x8xf32>
    %cst_13 = arith.constant dense<0.000000e+00> : vector<8x8xf32>
    %10 = tpu.matmul %1, %9, %cst_13 {dimension_numbers = #tpu.dot_dimension_numbers<[1], [0], [0], [1], [0, 0, 1, 1], [], []>} : vector<8x32xf32>, vector<32x8xf32>, vector<8x8xf32> -> vector<8x8xf32>
    %c0_14 = arith.constant 0 : index
    %c0_15 = arith.constant 0 : index
    %c0_16 = arith.constant 0 : index
    %c0_17 = arith.constant 0 : index
    %11 = vector.load %arg6[%c0_14, %c0_15, %c0_16, %c0_17] : memref<3x4x1x8xf32, #tpu.memory_space<vmem>>, vector<1x1x1x8xf32>
    %12 = vector.shape_cast %11 : vector<1x1x1x8xf32> to vector<1x8xf32>
    %13 = vector.broadcast %12 : vector<1x8xf32> to vector<8x8xf32>
    %14 = arith.addf %10, %13 : vector<8x8xf32>
    %c1 = arith.constant 1 : index
    %c0_18 = arith.constant 0 : index
    %c0_19 = arith.constant 0 : index
    %c0_20 = arith.constant 0 : index
    %15 = vector.load %arg5[%c1, %c0_18, %c0_19, %c0_20] : memref<3x4x32x8xf32, #tpu.memory_space<vmem>>, vector<1x1x32x8xf32>
    %16 = vector.shape_cast %15 : vector<1x1x32x8xf32> to vector<32x8xf32>
    %cst_21 = arith.constant dense<0.000000e+00> : vector<8x8xf32>
    %17 = tpu.matmul %3, %16, %cst_21 {dimension_numbers = #tpu.dot_dimension_numbers<[1], [0], [0], [1], [0, 0, 1, 1], [], []>} : vector<8x32xf32>, vector<32x8xf32>, vector<8x8xf32> -> vector<8x8xf32>
    %c1_22 = arith.constant 1 : index
    %c0_23 = arith.constant 0 : index
    %c0_24 = arith.constant 0 : index
    %c0_25 = arith.constant 0 : index
    %18 = vector.load %arg6[%c1_22, %c0_23, %c0_24, %c0_25] : memref<3x4x1x8xf32, #tpu.memory_space<vmem>>, vector<1x1x1x8xf32>
    %19 = vector.shape_cast %18 : vector<1x1x1x8xf32> to vector<1x8xf32>
    %20 = vector.broadcast %19 : vector<1x8xf32> to vector<8x8xf32>
    %21 = arith.addf %17, %20 : vector<8x8xf32>
    %c2 = arith.constant 2 : index
    %c0_26 = arith.constant 0 : index
    %c0_27 = arith.constant 0 : index
    %c0_28 = arith.constant 0 : index
    %22 = vector.load %arg5[%c2, %c0_26, %c0_27, %c0_28] : memref<3x4x32x8xf32, #tpu.memory_space<vmem>>, vector<1x1x32x8xf32>
    %23 = vector.shape_cast %22 : vector<1x1x32x8xf32> to vector<32x8xf32>
    %cst_29 = arith.constant dense<0.000000e+00> : vector<8x8xf32>
    %24 = tpu.matmul %5, %23, %cst_29 {dimension_numbers = #tpu.dot_dimension_numbers<[1], [0], [0], [1], [0, 0, 1, 1], [], []>} : vector<8x32xf32>, vector<32x8xf32>, vector<8x8xf32> -> vector<8x8xf32>
    %c2_30 = arith.constant 2 : index
    %c0_31 = arith.constant 0 : index
    %c0_32 = arith.constant 0 : index
    %c0_33 = arith.constant 0 : index
    %25 = vector.load %arg6[%c2_30, %c0_31, %c0_32, %c0_33] : memref<3x4x1x8xf32, #tpu.memory_space<vmem>>, vector<1x1x1x8xf32>
    %26 = vector.shape_cast %25 : vector<1x1x1x8xf32> to vector<1x8xf32>
    %27 = vector.broadcast %26 : vector<1x8xf32> to vector<8x8xf32>
    %28 = arith.addf %24, %27 : vector<8x8xf32>
    %cst_34 = arith.constant dense<0.000000e+00> : vector<8x8xf32>
    %29 = tpu.matmul %14, %21, %cst_34 {dimension_numbers = #tpu.dot_dimension_numbers<[1], [1], [0], [0], [0, 0, 1, 0], [], []>} : vector<8x8xf32>, vector<8x8xf32>, vector<8x8xf32> -> vector<8x8xf32>
    %cst_35 = arith.constant dense<0xFF800000> : vector<8xf32>
    %30 = vector.multi_reduction <maximumf>, %29, %cst_35 [1] : vector<8x8xf32> to vector<8xf32>
    %31 = vector.shape_cast %30 : vector<8xf32> to vector<8x1xf32>
    %32 = vector.broadcast %31 : vector<8x1xf32> to vector<8x8xf32>
    %33 = arith.subf %29, %32 : vector<8x8xf32>
    %34 = math.exp %33 : vector<8x8xf32>
    %cst_36 = arith.constant dense<0.000000e+00> : vector<8xf32>
    %35 = vector.multi_reduction <add>, %34, %cst_36 [1] : vector<8x8xf32> to vector<8xf32>
    %36 = vector.shape_cast %35 : vector<8xf32> to vector<8x1xf32>
    %37 = tpu.reciprocal %36 {approx = true} : vector<8x1xf32> -> vector<8x1xf32>
    %38 = vector.broadcast %37 : vector<8x1xf32> to vector<8x8xf32>
    %39 = arith.mulf %34, %38 : vector<8x8xf32>
    %40 = arith.addf %7, %39 : vector<8x8xf32>
    %cst_37 = arith.constant dense<0.000000e+00> : vector<8x8xf32>
    %41 = tpu.matmul %39, %28, %cst_37 {dimension_numbers = #tpu.dot_dimension_numbers<[1], [0], [0], [1], [0, 0, 1, 1], [], []>} : vector<8x8xf32>, vector<8x8xf32>, vector<8x8xf32> -> vector<8x8xf32>
    %c0_38 = arith.constant 0 : index
    %c0_39 = arith.constant 0 : index
    %c0_40 = arith.constant 0 : index
    %42 = vector.load %arg7[%c0_38, %c0_39, %c0_40] : memref<4x8x32xf32, #tpu.memory_space<vmem>>, vector<1x8x32xf32>
    %43 = vector.shape_cast %42 : vector<1x8x32xf32> to vector<8x32xf32>
    %cst_41 = arith.constant dense<0.000000e+00> : vector<8x32xf32>
    %44 = tpu.matmul %41, %43, %cst_41 {dimension_numbers = #tpu.dot_dimension_numbers<[1], [0], [0], [1], [0, 0, 1, 1], [], []>} : vector<8x8xf32>, vector<8x32xf32>, vector<8x32xf32> -> vector<8x32xf32>
    %45 = arith.addf %6, %44 : vector<8x32xf32>
    %c0_42 = arith.constant 0 : index
    %c1_43 = arith.constant 1 : index
    %c0_44 = arith.constant 0 : index
    %c0_45 = arith.constant 0 : index
    %46 = vector.load %arg5[%c0_42, %c1_43, %c0_44, %c0_45] : memref<3x4x32x8xf32, #tpu.memory_space<vmem>>, vector<1x1x32x8xf32>
    %47 = vector.shape_cast %46 : vector<1x1x32x8xf32> to vector<32x8xf32>
    %cst_46 = arith.constant dense<0.000000e+00> : vector<8x8xf32>
    %48 = tpu.matmul %1, %47, %cst_46 {dimension_numbers = #tpu.dot_dimension_numbers<[1], [0], [0], [1], [0, 0, 1, 1], [], []>} : vector<8x32xf32>, vector<32x8xf32>, vector<8x8xf32> -> vector<8x8xf32>
    %c0_47 = arith.constant 0 : index
    %c1_48 = arith.constant 1 : index
    %c0_49 = arith.constant 0 : index
    %c0_50 = arith.constant 0 : index
    %49 = vector.load %arg6[%c0_47, %c1_48, %c0_49, %c0_50] : memref<3x4x1x8xf32, #tpu.memory_space<vmem>>, vector<1x1x1x8xf32>
    %50 = vector.shape_cast %49 : vector<1x1x1x8xf32> to vector<1x8xf32>
    %51 = vector.broadcast %50 : vector<1x8xf32> to vector<8x8xf32>
    %52 = arith.addf %48, %51 : vector<8x8xf32>
    %c1_51 = arith.constant 1 : index
    %c1_52 = arith.constant 1 : index
    %c0_53 = arith.constant 0 : index
    %c0_54 = arith.constant 0 : index
    %53 = vector.load %arg5[%c1_51, %c1_52, %c0_53, %c0_54] : memref<3x4x32x8xf32, #tpu.memory_space<vmem>>, vector<1x1x32x8xf32>
    %54 = vector.shape_cast %53 : vector<1x1x32x8xf32> to vector<32x8xf32>
    %cst_55 = arith.constant dense<0.000000e+00> : vector<8x8xf32>
    %55 = tpu.matmul %3, %54, %cst_55 {dimension_numbers = #tpu.dot_dimension_numbers<[1], [0], [0], [1], [0, 0, 1, 1], [], []>} : vector<8x32xf32>, vector<32x8xf32>, vector<8x8xf32> -> vector<8x8xf32>
    %c1_56 = arith.constant 1 : index
    %c1_57 = arith.constant 1 : index
    %c0_58 = arith.constant 0 : index
    %c0_59 = arith.constant 0 : index
    %56 = vector.load %arg6[%c1_56, %c1_57, %c0_58, %c0_59] : memref<3x4x1x8xf32, #tpu.memory_space<vmem>>, vector<1x1x1x8xf32>
    %57 = vector.shape_cast %56 : vector<1x1x1x8xf32> to vector<1x8xf32>
    %58 = vector.broadcast %57 : vector<1x8xf32> to vector<8x8xf32>
    %59 = arith.addf %55, %58 : vector<8x8xf32>
    %c2_60 = arith.constant 2 : index
    %c1_61 = arith.constant 1 : index
    %c0_62 = arith.constant 0 : index
    %c0_63 = arith.constant 0 : index
    %60 = vector.load %arg5[%c2_60, %c1_61, %c0_62, %c0_63] : memref<3x4x32x8xf32, #tpu.memory_space<vmem>>, vector<1x1x32x8xf32>
    %61 = vector.shape_cast %60 : vector<1x1x32x8xf32> to vector<32x8xf32>
    %cst_64 = arith.constant dense<0.000000e+00> : vector<8x8xf32>
    %62 = tpu.matmul %5, %61, %cst_64 {dimension_numbers = #tpu.dot_dimension_numbers<[1], [0], [0], [1], [0, 0, 1, 1], [], []>} : vector<8x32xf32>, vector<32x8xf32>, vector<8x8xf32> -> vector<8x8xf32>
    %c2_65 = arith.constant 2 : index
    %c1_66 = arith.constant 1 : index
    %c0_67 = arith.constant 0 : index
    %c0_68 = arith.constant 0 : index
    %63 = vector.load %arg6[%c2_65, %c1_66, %c0_67, %c0_68] : memref<3x4x1x8xf32, #tpu.memory_space<vmem>>, vector<1x1x1x8xf32>
    %64 = vector.shape_cast %63 : vector<1x1x1x8xf32> to vector<1x8xf32>
    %65 = vector.broadcast %64 : vector<1x8xf32> to vector<8x8xf32>
    %66 = arith.addf %62, %65 : vector<8x8xf32>
    %cst_69 = arith.constant dense<0.000000e+00> : vector<8x8xf32>
    %67 = tpu.matmul %52, %59, %cst_69 {dimension_numbers = #tpu.dot_dimension_numbers<[1], [1], [0], [0], [0, 0, 1, 0], [], []>} : vector<8x8xf32>, vector<8x8xf32>, vector<8x8xf32> -> vector<8x8xf32>
    %cst_70 = arith.constant dense<0xFF800000> : vector<8xf32>
    %68 = vector.multi_reduction <maximumf>, %67, %cst_70 [1] : vector<8x8xf32> to vector<8xf32>
    %69 = vector.shape_cast %68 : vector<8xf32> to vector<8x1xf32>
    %70 = vector.broadcast %69 : vector<8x1xf32> to vector<8x8xf32>
    %71 = arith.subf %67, %70 : vector<8x8xf32>
    %72 = math.exp %71 : vector<8x8xf32>
    %cst_71 = arith.constant dense<0.000000e+00> : vector<8xf32>
    %73 = vector.multi_reduction <add>, %72, %cst_71 [1] : vector<8x8xf32> to vector<8xf32>
    %74 = vector.shape_cast %73 : vector<8xf32> to vector<8x1xf32>
    %75 = tpu.reciprocal %74 {approx = true} : vector<8x1xf32> -> vector<8x1xf32>
    %76 = vector.broadcast %75 : vector<8x1xf32> to vector<8x8xf32>
    %77 = arith.mulf %72, %76 : vector<8x8xf32>
    %78 = arith.addf %40, %77 : vector<8x8xf32>
    %cst_72 = arith.constant dense<0.000000e+00> : vector<8x8xf32>
    %79 = tpu.matmul %77, %66, %cst_72 {dimension_numbers = #tpu.dot_dimension_numbers<[1], [0], [0], [1], [0, 0, 1, 1], [], []>} : vector<8x8xf32>, vector<8x8xf32>, vector<8x8xf32> -> vector<8x8xf32>
    %c1_73 = arith.constant 1 : index
    %c0_74 = arith.constant 0 : index
    %c0_75 = arith.constant 0 : index
    %80 = vector.load %arg7[%c1_73, %c0_74, %c0_75] : memref<4x8x32xf32, #tpu.memory_space<vmem>>, vector<1x8x32xf32>
    %81 = vector.shape_cast %80 : vector<1x8x32xf32> to vector<8x32xf32>
    %cst_76 = arith.constant dense<0.000000e+00> : vector<8x32xf32>
    %82 = tpu.matmul %79, %81, %cst_76 {dimension_numbers = #tpu.dot_dimension_numbers<[1], [0], [0], [1], [0, 0, 1, 1], [], []>} : vector<8x8xf32>, vector<8x32xf32>, vector<8x32xf32> -> vector<8x32xf32>
    %83 = arith.addf %45, %82 : vector<8x32xf32>
    %c0_77 = arith.constant 0 : index
    %c2_78 = arith.constant 2 : index
    %c0_79 = arith.constant 0 : index
    %c0_80 = arith.constant 0 : index
    %84 = vector.load %arg5[%c0_77, %c2_78, %c0_79, %c0_80] : memref<3x4x32x8xf32, #tpu.memory_space<vmem>>, vector<1x1x32x8xf32>
    %85 = vector.shape_cast %84 : vector<1x1x32x8xf32> to vector<32x8xf32>
    %cst_81 = arith.constant dense<0.000000e+00> : vector<8x8xf32>
    %86 = tpu.matmul %1, %85, %cst_81 {dimension_numbers = #tpu.dot_dimension_numbers<[1], [0], [0], [1], [0, 0, 1, 1], [], []>} : vector<8x32xf32>, vector<32x8xf32>, vector<8x8xf32> -> vector<8x8xf32>
    %c0_82 = arith.constant 0 : index
    %c2_83 = arith.constant 2 : index
    %c0_84 = arith.constant 0 : index
    %c0_85 = arith.constant 0 : index
    %87 = vector.load %arg6[%c0_82, %c2_83, %c0_84, %c0_85] : memref<3x4x1x8xf32, #tpu.memory_space<vmem>>, vector<1x1x1x8xf32>
    %88 = vector.shape_cast %87 : vector<1x1x1x8xf32> to vector<1x8xf32>
    %89 = vector.broadcast %88 : vector<1x8xf32> to vector<8x8xf32>
    %90 = arith.addf %86, %89 : vector<8x8xf32>
    %c1_86 = arith.constant 1 : index
    %c2_87 = arith.constant 2 : index
    %c0_88 = arith.constant 0 : index
    %c0_89 = arith.constant 0 : index
    %91 = vector.load %arg5[%c1_86, %c2_87, %c0_88, %c0_89] : memref<3x4x32x8xf32, #tpu.memory_space<vmem>>, vector<1x1x32x8xf32>
    %92 = vector.shape_cast %91 : vector<1x1x32x8xf32> to vector<32x8xf32>
    %cst_90 = arith.constant dense<0.000000e+00> : vector<8x8xf32>
    %93 = tpu.matmul %3, %92, %cst_90 {dimension_numbers = #tpu.dot_dimension_numbers<[1], [0], [0], [1], [0, 0, 1, 1], [], []>} : vector<8x32xf32>, vector<32x8xf32>, vector<8x8xf32> -> vector<8x8xf32>
    %c1_91 = arith.constant 1 : index
    %c2_92 = arith.constant 2 : index
    %c0_93 = arith.constant 0 : index
    %c0_94 = arith.constant 0 : index
    %94 = vector.load %arg6[%c1_91, %c2_92, %c0_93, %c0_94] : memref<3x4x1x8xf32, #tpu.memory_space<vmem>>, vector<1x1x1x8xf32>
    %95 = vector.shape_cast %94 : vector<1x1x1x8xf32> to vector<1x8xf32>
    %96 = vector.broadcast %95 : vector<1x8xf32> to vector<8x8xf32>
    %97 = arith.addf %93, %96 : vector<8x8xf32>
    %c2_95 = arith.constant 2 : index
    %c2_96 = arith.constant 2 : index
    %c0_97 = arith.constant 0 : index
    %c0_98 = arith.constant 0 : index
    %98 = vector.load %arg5[%c2_95, %c2_96, %c0_97, %c0_98] : memref<3x4x32x8xf32, #tpu.memory_space<vmem>>, vector<1x1x32x8xf32>
    %99 = vector.shape_cast %98 : vector<1x1x32x8xf32> to vector<32x8xf32>
    %cst_99 = arith.constant dense<0.000000e+00> : vector<8x8xf32>
    %100 = tpu.matmul %5, %99, %cst_99 {dimension_numbers = #tpu.dot_dimension_numbers<[1], [0], [0], [1], [0, 0, 1, 1], [], []>} : vector<8x32xf32>, vector<32x8xf32>, vector<8x8xf32> -> vector<8x8xf32>
    %c2_100 = arith.constant 2 : index
    %c2_101 = arith.constant 2 : index
    %c0_102 = arith.constant 0 : index
    %c0_103 = arith.constant 0 : index
    %101 = vector.load %arg6[%c2_100, %c2_101, %c0_102, %c0_103] : memref<3x4x1x8xf32, #tpu.memory_space<vmem>>, vector<1x1x1x8xf32>
    %102 = vector.shape_cast %101 : vector<1x1x1x8xf32> to vector<1x8xf32>
    %103 = vector.broadcast %102 : vector<1x8xf32> to vector<8x8xf32>
    %104 = arith.addf %100, %103 : vector<8x8xf32>
    %cst_104 = arith.constant dense<0.000000e+00> : vector<8x8xf32>
    %105 = tpu.matmul %90, %97, %cst_104 {dimension_numbers = #tpu.dot_dimension_numbers<[1], [1], [0], [0], [0, 0, 1, 0], [], []>} : vector<8x8xf32>, vector<8x8xf32>, vector<8x8xf32> -> vector<8x8xf32>
    %cst_105 = arith.constant dense<0xFF800000> : vector<8xf32>
    %106 = vector.multi_reduction <maximumf>, %105, %cst_105 [1] : vector<8x8xf32> to vector<8xf32>
    %107 = vector.shape_cast %106 : vector<8xf32> to vector<8x1xf32>
    %108 = vector.broadcast %107 : vector<8x1xf32> to vector<8x8xf32>
    %109 = arith.subf %105, %108 : vector<8x8xf32>
    %110 = math.exp %109 : vector<8x8xf32>
    %cst_106 = arith.constant dense<0.000000e+00> : vector<8xf32>
    %111 = vector.multi_reduction <add>, %110, %cst_106 [1] : vector<8x8xf32> to vector<8xf32>
    %112 = vector.shape_cast %111 : vector<8xf32> to vector<8x1xf32>
    %113 = tpu.reciprocal %112 {approx = true} : vector<8x1xf32> -> vector<8x1xf32>
    %114 = vector.broadcast %113 : vector<8x1xf32> to vector<8x8xf32>
    %115 = arith.mulf %110, %114 : vector<8x8xf32>
    %116 = arith.addf %78, %115 : vector<8x8xf32>
    %cst_107 = arith.constant dense<0.000000e+00> : vector<8x8xf32>
    %117 = tpu.matmul %115, %104, %cst_107 {dimension_numbers = #tpu.dot_dimension_numbers<[1], [0], [0], [1], [0, 0, 1, 1], [], []>} : vector<8x8xf32>, vector<8x8xf32>, vector<8x8xf32> -> vector<8x8xf32>
    %c2_108 = arith.constant 2 : index
    %c0_109 = arith.constant 0 : index
    %c0_110 = arith.constant 0 : index
    %118 = vector.load %arg7[%c2_108, %c0_109, %c0_110] : memref<4x8x32xf32, #tpu.memory_space<vmem>>, vector<1x8x32xf32>
    %119 = vector.shape_cast %118 : vector<1x8x32xf32> to vector<8x32xf32>
    %cst_111 = arith.constant dense<0.000000e+00> : vector<8x32xf32>
    %120 = tpu.matmul %117, %119, %cst_111 {dimension_numbers = #tpu.dot_dimension_numbers<[1], [0], [0], [1], [0, 0, 1, 1], [], []>} : vector<8x8xf32>, vector<8x32xf32>, vector<8x32xf32> -> vector<8x32xf32>
    %121 = arith.addf %83, %120 : vector<8x32xf32>
    %c0_112 = arith.constant 0 : index
    %c3 = arith.constant 3 : index
    %c0_113 = arith.constant 0 : index
    %c0_114 = arith.constant 0 : index
    %122 = vector.load %arg5[%c0_112, %c3, %c0_113, %c0_114] : memref<3x4x32x8xf32, #tpu.memory_space<vmem>>, vector<1x1x32x8xf32>
    %123 = vector.shape_cast %122 : vector<1x1x32x8xf32> to vector<32x8xf32>
    %cst_115 = arith.constant dense<0.000000e+00> : vector<8x8xf32>
    %124 = tpu.matmul %1, %123, %cst_115 {dimension_numbers = #tpu.dot_dimension_numbers<[1], [0], [0], [1], [0, 0, 1, 1], [], []>} : vector<8x32xf32>, vector<32x8xf32>, vector<8x8xf32> -> vector<8x8xf32>
    %c0_116 = arith.constant 0 : index
    %c3_117 = arith.constant 3 : index
    %c0_118 = arith.constant 0 : index
    %c0_119 = arith.constant 0 : index
    %125 = vector.load %arg6[%c0_116, %c3_117, %c0_118, %c0_119] : memref<3x4x1x8xf32, #tpu.memory_space<vmem>>, vector<1x1x1x8xf32>
    %126 = vector.shape_cast %125 : vector<1x1x1x8xf32> to vector<1x8xf32>
    %127 = vector.broadcast %126 : vector<1x8xf32> to vector<8x8xf32>
    %128 = arith.addf %124, %127 : vector<8x8xf32>
    %c1_120 = arith.constant 1 : index
    %c3_121 = arith.constant 3 : index
    %c0_122 = arith.constant 0 : index
    %c0_123 = arith.constant 0 : index
    %129 = vector.load %arg5[%c1_120, %c3_121, %c0_122, %c0_123] : memref<3x4x32x8xf32, #tpu.memory_space<vmem>>, vector<1x1x32x8xf32>
    %130 = vector.shape_cast %129 : vector<1x1x32x8xf32> to vector<32x8xf32>
    %cst_124 = arith.constant dense<0.000000e+00> : vector<8x8xf32>
    %131 = tpu.matmul %3, %130, %cst_124 {dimension_numbers = #tpu.dot_dimension_numbers<[1], [0], [0], [1], [0, 0, 1, 1], [], []>} : vector<8x32xf32>, vector<32x8xf32>, vector<8x8xf32> -> vector<8x8xf32>
    %c1_125 = arith.constant 1 : index
    %c3_126 = arith.constant 3 : index
    %c0_127 = arith.constant 0 : index
    %c0_128 = arith.constant 0 : index
    %132 = vector.load %arg6[%c1_125, %c3_126, %c0_127, %c0_128] : memref<3x4x1x8xf32, #tpu.memory_space<vmem>>, vector<1x1x1x8xf32>
    %133 = vector.shape_cast %132 : vector<1x1x1x8xf32> to vector<1x8xf32>
    %134 = vector.broadcast %133 : vector<1x8xf32> to vector<8x8xf32>
    %135 = arith.addf %131, %134 : vector<8x8xf32>
    %c2_129 = arith.constant 2 : index
    %c3_130 = arith.constant 3 : index
    %c0_131 = arith.constant 0 : index
    %c0_132 = arith.constant 0 : index
    %136 = vector.load %arg5[%c2_129, %c3_130, %c0_131, %c0_132] : memref<3x4x32x8xf32, #tpu.memory_space<vmem>>, vector<1x1x32x8xf32>
    %137 = vector.shape_cast %136 : vector<1x1x32x8xf32> to vector<32x8xf32>
    %cst_133 = arith.constant dense<0.000000e+00> : vector<8x8xf32>
    %138 = tpu.matmul %5, %137, %cst_133 {dimension_numbers = #tpu.dot_dimension_numbers<[1], [0], [0], [1], [0, 0, 1, 1], [], []>} : vector<8x32xf32>, vector<32x8xf32>, vector<8x8xf32> -> vector<8x8xf32>
    %c2_134 = arith.constant 2 : index
    %c3_135 = arith.constant 3 : index
    %c0_136 = arith.constant 0 : index
    %c0_137 = arith.constant 0 : index
    %139 = vector.load %arg6[%c2_134, %c3_135, %c0_136, %c0_137] : memref<3x4x1x8xf32, #tpu.memory_space<vmem>>, vector<1x1x1x8xf32>
    %140 = vector.shape_cast %139 : vector<1x1x1x8xf32> to vector<1x8xf32>
    %141 = vector.broadcast %140 : vector<1x8xf32> to vector<8x8xf32>
    %142 = arith.addf %138, %141 : vector<8x8xf32>
    %cst_138 = arith.constant dense<0.000000e+00> : vector<8x8xf32>
    %143 = tpu.matmul %128, %135, %cst_138 {dimension_numbers = #tpu.dot_dimension_numbers<[1], [1], [0], [0], [0, 0, 1, 0], [], []>} : vector<8x8xf32>, vector<8x8xf32>, vector<8x8xf32> -> vector<8x8xf32>
    %cst_139 = arith.constant dense<0xFF800000> : vector<8xf32>
    %144 = vector.multi_reduction <maximumf>, %143, %cst_139 [1] : vector<8x8xf32> to vector<8xf32>
    %145 = vector.shape_cast %144 : vector<8xf32> to vector<8x1xf32>
    %146 = vector.broadcast %145 : vector<8x1xf32> to vector<8x8xf32>
    %147 = arith.subf %143, %146 : vector<8x8xf32>
    %148 = math.exp %147 : vector<8x8xf32>
    %cst_140 = arith.constant dense<0.000000e+00> : vector<8xf32>
    %149 = vector.multi_reduction <add>, %148, %cst_140 [1] : vector<8x8xf32> to vector<8xf32>
    %150 = vector.shape_cast %149 : vector<8xf32> to vector<8x1xf32>
    %151 = tpu.reciprocal %150 {approx = true} : vector<8x1xf32> -> vector<8x1xf32>
    %152 = vector.broadcast %151 : vector<8x1xf32> to vector<8x8xf32>
    %153 = arith.mulf %148, %152 : vector<8x8xf32>
    %154 = arith.addf %116, %153 : vector<8x8xf32>
    %cst_141 = arith.constant dense<0.000000e+00> : vector<8x8xf32>
    %155 = tpu.matmul %153, %142, %cst_141 {dimension_numbers = #tpu.dot_dimension_numbers<[1], [0], [0], [1], [0, 0, 1, 1], [], []>} : vector<8x8xf32>, vector<8x8xf32>, vector<8x8xf32> -> vector<8x8xf32>
    %c3_142 = arith.constant 3 : index
    %c0_143 = arith.constant 0 : index
    %c0_144 = arith.constant 0 : index
    %156 = vector.load %arg7[%c3_142, %c0_143, %c0_144] : memref<4x8x32xf32, #tpu.memory_space<vmem>>, vector<1x8x32xf32>
    %157 = vector.shape_cast %156 : vector<1x8x32xf32> to vector<8x32xf32>
    %cst_145 = arith.constant dense<0.000000e+00> : vector<8x32xf32>
    %158 = tpu.matmul %155, %157, %cst_145 {dimension_numbers = #tpu.dot_dimension_numbers<[1], [0], [0], [1], [0, 0, 1, 1], [], []>} : vector<8x8xf32>, vector<8x32xf32>, vector<8x32xf32> -> vector<8x32xf32>
    %159 = arith.addf %121, %158 : vector<8x32xf32>
    %c0_146 = arith.constant 0 : index
    %c0_147 = arith.constant 0 : index
    %160 = vector.load %arg8[%c0_146, %c0_147] : memref<1x32xf32, #tpu.memory_space<vmem>>, vector<1x32xf32>
    %161 = vector.broadcast %160 : vector<1x32xf32> to vector<8x32xf32>
    %162 = arith.addf %159, %161 : vector<8x32xf32>
    %c0_148 = arith.constant 0 : index
    %c0_149 = arith.constant 0 : index
    %c0_150 = arith.constant 0 : index
    %163 = vector.load %arg9[%c0_148, %c0_149, %c0_150] : memref<1x8x32xf32, #tpu.memory_space<vmem>>, vector<1x8x32xf32>
    %164 = vector.shape_cast %163 : vector<1x8x32xf32> to vector<8x32xf32>
    %165 = vector.shape_cast %162 : vector<8x32xf32> to vector<1x8x32xf32>
    tpu.vector_store %arg9[%c0_148, %c0_149, %c0_150], %165 {strides = array<i32>} : memref<1x8x32xf32, #tpu.memory_space<vmem>>, vector<1x8x32xf32>,
    %c0_151 = arith.constant 0 : index
    %c0_152 = arith.constant 0 : index
    %c0_153 = arith.constant 0 : index
    %166 = vector.load %arg10[%c0_151, %c0_152, %c0_153] : memref<1x8x8xf32, #tpu.memory_space<vmem>>, vector<1x8x8xf32>
    %167 = vector.shape_cast %166 : vector<1x8x8xf32> to vector<8x8xf32>
    %168 = vector.shape_cast %154 : vector<8x8xf32> to vector<1x8x8xf32>
    tpu.vector_store %arg10[%c0_151, %c0_152, %c0_153], %168 {strides = array<i32>} : memref<1x8x8xf32, #tpu.memory_space<vmem>>, vector<1x8x8xf32>,
    return
  }
  func.func @transform_0(%arg0: i32, %arg1: i32) -> (i32, i32, i32) {
    %c0_i32 = arith.constant 0 : i32
    %c0_i32_0 = arith.constant 0 : i32
    return %arg0, %arg1, %c0_i32 : i32, i32, i32
  }
  func.func @transform_1(%arg0: i32, %arg1: i32) -> (i32, i32, i32) {
    %c0_i32 = arith.constant 0 : i32
    %c0_i32_0 = arith.constant 0 : i32
    %c0_i32_1 = arith.constant 0 : i32
    return %arg0, %c0_i32, %c0_i32_0 : i32, i32, i32
  }
  func.func @transform_2(%arg0: i32, %arg1: i32) -> (i32, i32, i32) {
    %c0_i32 = arith.constant 0 : i32
    %c0_i32_0 = arith.constant 0 : i32
    %c0_i32_1 = arith.constant 0 : i32
    return %arg0, %c0_i32, %c0_i32_0 : i32, i32, i32
  }
  func.func @transform_3(%arg0: i32, %arg1: i32) -> (i32, i32, i32, i32) {
    %c0_i32 = arith.constant 0 : i32
    %c0_i32_0 = arith.constant 0 : i32
    %c0_i32_1 = arith.constant 0 : i32
    %c0_i32_2 = arith.constant 0 : i32
    %c0_i32_3 = arith.constant 0 : i32
    return %c0_i32, %c0_i32_0, %c0_i32_1, %c0_i32_2 : i32, i32, i32, i32
  }
  func.func @transform_4(%arg0: i32, %arg1: i32) -> (i32, i32, i32, i32) {
    %c0_i32 = arith.constant 0 : i32
    %c0_i32_0 = arith.constant 0 : i32
    %c0_i32_1 = arith.constant 0 : i32
    %c0_i32_2 = arith.constant 0 : i32
    %c0_i32_3 = arith.constant 0 : i32
    return %c0_i32, %c0_i32_0, %c0_i32_1, %c0_i32_2 : i32, i32, i32, i32
  }
  func.func @transform_5(%arg0: i32, %arg1: i32) -> (i32, i32, i32) {
    %c0_i32 = arith.constant 0 : i32
    %c0_i32_0 = arith.constant 0 : i32
    %c0_i32_1 = arith.constant 0 : i32
    %c0_i32_2 = arith.constant 0 : i32
    return %c0_i32, %c0_i32_0, %c0_i32_1 : i32, i32, i32
  }
  func.func @transform_6(%arg0: i32, %arg1: i32) -> (i32, i32) {
    %c0_i32 = arith.constant 0 : i32
    %c0_i32_0 = arith.constant 0 : i32
    %c0_i32_1 = arith.constant 0 : i32
    return %c0_i32, %c0_i32_0 : i32, i32
  }
  func.func @transform_7(%arg0: i32, %arg1: i32) -> (i32, i32, i32) {
    %c0_i32 = arith.constant 0 : i32
    %c0_i32_0 = arith.constant 0 : i32
    return %arg0, %arg1, %c0_i32 : i32, i32, i32
  }
  func.func @transform_8(%arg0: i32, %arg1: i32) -> (i32, i32, i32) {
    %c0_i32 = arith.constant 0 : i32
    %c0_i32_0 = arith.constant 0 : i32
    return %arg0, %arg1, %c0_i32 : i32, i32, i32
  }
}

</mosaic_0001>

<llo_original>
// kernel: tpu_custom_call.1
$region0: #{tpu_custom_call.1}
  #allocation0 [shape = 'u32[]', space=smem, size = 0x4, offset = 0x4, fixed_abs, tag = 'smem constant byte address 0x4 - core index']
  #allocation1 [shape = 'u32[144,128]{1,0:T(1,128)}', space=vmem, size = 0x12000, scoped, tag = 'internal scratch']
  %s0 = inlined_call_operand.vmem [shape: f32[2,8,32], index: 0, kind: input, shape index: {}]
  %s1 = inlined_call_operand.vmem [shape: f32[2,8,32], index: 1, kind: input, shape index: {}]
  %s2 = inlined_call_operand.vmem [shape: f32[2,8,32], index: 2, kind: input, shape index: {}]
  %s3 = inlined_call_operand.vmem [shape: f32[3,4,32,8], index: 3, kind: input, shape index: {}]
  %s4 = inlined_call_operand.vmem [shape: f32[3,4,1,8], index: 4, kind: input, shape index: {}]
  %s5 = inlined_call_operand.vmem [shape: f32[4,8,32], index: 5, kind: input, shape index: {}]
  %s6 = inlined_call_operand.vmem [shape: f32[1,32], index: 6, kind: input, shape index: {}]
  %s7 = inlined_call_operand.hbm [shape: f32[2,8,32], index: 7, kind: output, shape index: {0}]
  %s8 = inlined_call_operand.hbm [shape: f32[2,8,8], index: 8, kind: output, shape index: {1}]
  %9 = xla_tuple %s7, %s8
  %s10 = sld [smem:[#allocation0]]
  $region69: #{tpu_custom_call.1} parent=0
    _
  %s12 = ssub.s32 1, %s10
  %s13 = scalar_select 0, %s12, %s10
  $region1: #{tpu_custom_call.1} parent=0
    #allocation2 [shape = 'u8[8192]{0}', space=vmem, size = 0x2000, scoped, tag = 'output window, operand 0']
    #allocation3 [shape = 's32[2]{0}', space=sflag, size = 0x8, scoped, tag = 'scoped memory for tpu_custom_call.1']
    #allocation4 [shape = 'u8[8192]{0}', space=vmem, size = 0x2000, scoped, tag = 'output window, operand 1']
    #allocation5 [shape = 's32[2]{0}', space=sflag, size = 0x8, scoped, tag = 'scoped memory for tpu_custom_call.1']
    %14 = vsyncpa [#allocation3], 0
    %s15 = scalar_lea.sflag [#allocation3], 1
    %16 = vsyncpa %s15, 0
    %17 = vsyncpa [#allocation5], 0
    %s18 = scalar_lea.sflag [#allocation5], 1
    %19 = vsyncpa %s18, 0
    loop: start=0, step=1, limit=4
    $region2: #{tpu_custom_call.1} parent=1 // loop_pre_header
      _
    $region3: #{tpu_custom_call.1} parent=1 // loop_header
      %s21 = sphi 0, %s25
      %p22 = scmp.ge.s32.totalorder %s21, 4
      %s28 = sphi 0, %s40
      %s29 = sphi 0, %s36
      %s30 = sphi 0, %s28
      %s31 = sphi 0, %s29
      %s32 = sphi 0, %s30
      %s33 = sphi 0, %s31
      %s45 = sphi 0, %s47
      %s48 = sphi 0, %s45
      %s49 = sphi 0, %s48
      %s65 = sphi 0, %s49
      %s71 = sphi 0, %s73
      %s74 = sphi 0, %s71
      %s75 = sphi 0, %s74
      %s91 = sphi 0, %s75
      %s97 = sphi 0, %s99
      %s100 = sphi 0, %s97
      %s101 = sphi 0, %s100
      %s117 = sphi 0, %s101
      %s121 = sphi 0, %s121
      %s123 = sphi 0, %s121
      %s124 = sphi 0, %s123
      %s138 = sphi 0, %s124
      %s142 = sphi 0, %s142
      %s144 = sphi 0, %s142
      %s145 = sphi 0, %s144
      %s159 = sphi 0, %s145
      %s163 = sphi 0, %s163
      %s165 = sphi 0, %s163
      %s166 = sphi 0, %s165
      %s180 = sphi 0, %s166
      %s184 = sphi 0, %s184
      %s186 = sphi 0, %s184
      %s187 = sphi 0, %s186
      %s201 = sphi 0, %s187
      %s209 = sphi 0, %s211
      %s212 = sphi 0, %s209
      %s213 = sphi 0, %s212
      %s229 = sphi 0, %s213
      %s237 = sphi 0, %s239
      %s240 = sphi 0, %s237
      %s241 = sphi 0, %s240
      %s257 = sphi 0, %s241
    $region4: #{tpu_custom_call.1} parent=1 // loop_header_branch
      %24 = sbr.rel (%p22) target = $region8
    $region5: #{tpu_custom_call.1} parent=1 // loop_body
      %s26 = ssub.s32 %s21, 1
      %s27 = ssub.s32 %s21, 2
      %s34 = sadd.s32 1, %s29
      %p35 = scmp.ge.s32.totalorder %s34, 1
      %s36 = scalar_select %p35, 0, %s34
      %s37 = sadd.s32 1, %s28
      %s38 = scalar_select %p35, %s37, %s28
      %p39 = scmp.ge.s32.totalorder %s38, 2
      %s40 = scalar_select %p39, 0, %s38
      %s41 = ssub.s32 %s28, %s40
      %s42 = ssub.s32 %s29, %s36
      %s43 = sor.u32 %s41, %s42
      %p44 = scmp.eq.s32.totalorder %s43, 0
      %s46 = sadd.s32 %s45, 1
      %s47 = scalar_select %p44, %s45, %s46
      %p50 = pneg %p44
      %p51 = scmp.eq.s32.totalorder %s21, 1
      %p52 = por %p50, %p51
      %p53 = scmp.ne.s32.totalorder %s45, %s48
      %p54 = scmp.eq.s32.totalorder %s21, 0
      %p55 = por %p53, %p54
      %p56 = scmp.ne.s32.totalorder %s45, %s48
      %p57 = scmp.eq.s32.totalorder %s26, 1
      %p58 = por %p56, %p57
      %p59 = scmp.ne.s32.totalorder %s48, %s49
      %p60 = scmp.eq.s32.totalorder %s26, 0
      %p61 = por %p59, %p60
      %p62 = scmp.ne.s32.totalorder %s48, %s49
      %p63 = scmp.eq.s32.totalorder %s27, 1
      %p64 = por %p62, %p63
      %p66 = scmp.ne.s32.totalorder %s49, %s65
      %p67 = scmp.eq.s32.totalorder %s27, 0
      %p68 = por %p66, %p67
      %s69 = ssub.s32 %s28, %s40
      %p70 = scmp.eq.s32.totalorder %s69, 0
      %s72 = sadd.s32 %s71, 1
      %s73 = scalar_select %p70, %s71, %s72
      %p76 = pneg %p70
      %p77 = scmp.eq.s32.totalorder %s21, 1
      %p78 = por %p76, %p77
      %p79 = scmp.ne.s32.totalorder %s71, %s74
      %p80 = scmp.eq.s32.totalorder %s21, 0
      %p81 = por %p79, %p80
      %p82 = scmp.ne.s32.totalorder %s71, %s74
      %p83 = scmp.eq.s32.totalorder %s26, 1
      %p84 = por %p82, %p83
      %p85 = scmp.ne.s32.totalorder %s74, %s75
      %p86 = scmp.eq.s32.totalorder %s26, 0
      %p87 = por %p85, %p86
      %p88 = scmp.ne.s32.totalorder %s74, %s75
      %p89 = scmp.eq.s32.totalorder %s27, 1
      %p90 = por %p88, %p89
      %p92 = scmp.ne.s32.totalorder %s75, %s91
      %p93 = scmp.eq.s32.totalorder %s27, 0
      %p94 = por %p92, %p93
      %s95 = ssub.s32 %s28, %s40
      %p96 = scmp.eq.s32.totalorder %s95, 0
      %s98 = sadd.s32 %s97, 1
      %s99 = scalar_select %p96, %s97, %s98
      %p102 = pneg %p96
      %p103 = scmp.eq.s32.totalorder %s21, 1
      %p104 = por %p102, %p103
      %p105 = scmp.ne.s32.totalorder %s97, %s100
      %p106 = scmp.eq.s32.totalorder %s21, 0
      %p107 = por %p105, %p106
      %p108 = scmp.ne.s32.totalorder %s97, %s100
      %p109 = scmp.eq.s32.totalorder %s26, 1
      %p110 = por %p108, %p109
      %p111 = scmp.ne.s32.totalorder %s100, %s101
      %p112 = scmp.eq.s32.totalorder %s26, 0
      %p113 = por %p111, %p112
      %p114 = scmp.ne.s32.totalorder %s100, %s101
      %p115 = scmp.eq.s32.totalorder %s27, 1
      %p116 = por %p114, %p115
      %p118 = scmp.ne.s32.totalorder %s101, %s117
      %p119 = scmp.eq.s32.totalorder %s27, 0
      %p120 = por %p118, %p119
      %s122 = sadd.s32 %s121, 1
      %p125 = scmp.eq.s32.totalorder %s21, 1
      %p126 = scmp.ne.s32.totalorder %s121, %s123
      %p127 = scmp.eq.s32.totalorder %s21, 0
      %p128 = por %p126, %p127
      %p129 = scmp.ne.s32.totalorder %s121, %s123
      %p130 = scmp.eq.s32.totalorder %s26, 1
      %p131 = por %p129, %p130
      %p132 = scmp.ne.s32.totalorder %s123, %s124
      %p133 = scmp.eq.s32.totalorder %s26, 0
      %p134 = por %p132, %p133
      %p135 = scmp.ne.s32.totalorder %s123, %s124
      %p136 = scmp.eq.s32.totalorder %s27, 1
      %p137 = por %p135, %p136
      %p139 = scmp.ne.s32.totalorder %s124, %s138
      %p140 = scmp.eq.s32.totalorder %s27, 0
      %p141 = por %p139, %p140
      %s143 = sadd.s32 %s142, 1
      %p146 = scmp.eq.s32.totalorder %s21, 1
      %p147 = scmp.ne.s32.totalorder %s142, %s144
      %p148 = scmp.eq.s32.totalorder %s21, 0
      %p149 = por %p147, %p148
      %p150 = scmp.ne.s32.totalorder %s142, %s144
      %p151 = scmp.eq.s32.totalorder %s26, 1
      %p152 = por %p150, %p151
      %p153 = scmp.ne.s32.totalorder %s144, %s145
      %p154 = scmp.eq.s32.totalorder %s26, 0
      %p155 = por %p153, %p154
      %p156 = scmp.ne.s32.totalorder %s144, %s145
      %p157 = scmp.eq.s32.totalorder %s27, 1
      %p158 = por %p156, %p157
      %p160 = scmp.ne.s32.totalorder %s145, %s159
      %p161 = scmp.eq.s32.totalorder %s27, 0
      %p162 = por %p160, %p161
      %s164 = sadd.s32 %s163, 1
      %p167 = scmp.eq.s32.totalorder %s21, 1
      %p168 = scmp.ne.s32.totalorder %s163, %s165
      %p169 = scmp.eq.s32.totalorder %s21, 0
      %p170 = por %p168, %p169
      %p171 = scmp.ne.s32.totalorder %s163, %s165
      %p172 = scmp.eq.s32.totalorder %s26, 1
      %p173 = por %p171, %p172
      %p174 = scmp.ne.s32.totalorder %s165, %s166
      %p175 = scmp.eq.s32.totalorder %s26, 0
      %p176 = por %p174, %p175
      %p177 = scmp.ne.s32.totalorder %s165, %s166
      %p178 = scmp.eq.s32.totalorder %s27, 1
      %p179 = por %p177, %p178
      %p181 = scmp.ne.s32.totalorder %s166, %s180
      %p182 = scmp.eq.s32.totalorder %s27, 0
      %p183 = por %p181, %p182
      %s185 = sadd.s32 %s184, 1
      %p188 = scmp.eq.s32.totalorder %s21, 1
      %p189 = scmp.ne.s32.totalorder %s184, %s186
      %p190 = scmp.eq.s32.totalorder %s21, 0
      %p191 = por %p189, %p190
      %p192 = scmp.ne.s32.totalorder %s184, %s186
      %p193 = scmp.eq.s32.totalorder %s26, 1
      %p194 = por %p192, %p193
      %p195 = scmp.ne.s32.totalorder %s186, %s187
      %p196 = scmp.eq.s32.totalorder %s26, 0
      %p197 = por %p195, %p196
      %p198 = scmp.ne.s32.totalorder %s186, %s187
      %p199 = scmp.eq.s32.totalorder %s27, 1
      %p200 = por %p198, %p199
      %p202 = scmp.ne.s32.totalorder %s187, %s201
      %p203 = scmp.eq.s32.totalorder %s27, 0
      %p204 = por %p202, %p203
      %s205 = ssub.s32 %s28, %s40
      %s206 = ssub.s32 %s29, %s36
      %s207 = sor.u32 %s205, %s206
      %p208 = scmp.eq.s32.totalorder %s207, 0
      %s210 = sadd.s32 %s209, 1
      %s211 = scalar_select %p208, %s209, %s210
      %p214 = pneg %p208
      %p215 = scmp.eq.s32.totalorder %s21, 1
      %p216 = por %p214, %p215
      %p217 = scmp.ne.s32.totalorder %s209, %s212
      %p218 = scmp.eq.s32.totalorder %s21, 0
      %p219 = por %p217, %p218
      %p220 = scmp.ne.s32.totalorder %s209, %s212
      %p221 = scmp.eq.s32.totalorder %s26, 1
      %p222 = por %p220, %p221
      %p223 = scmp.ne.s32.totalorder %s212, %s213
      %p224 = scmp.eq.s32.totalorder %s26, 0
      %p225 = por %p223, %p224
      %p226 = scmp.ne.s32.totalorder %s212, %s213
      %p227 = scmp.eq.s32.totalorder %s27, 1
      %p228 = por %p226, %p227
      %p230 = scmp.ne.s32.totalorder %s213, %s229
      %p231 = scmp.eq.s32.totalorder %s27, 0
      %p232 = por %p230, %p231
      %s233 = ssub.s32 %s28, %s40
      %s234 = ssub.s32 %s29, %s36
      %s235 = sor.u32 %s233, %s234
      %p236 = scmp.eq.s32.totalorder %s235, 0
      %s238 = sadd.s32 %s237, 1
      %s239 = scalar_select %p236, %s237, %s238
      %p242 = pneg %p236
      %p243 = scmp.eq.s32.totalorder %s21, 1
      %p244 = por %p242, %p243
      %p245 = scmp.ne.s32.totalorder %s237, %s240
      %p246 = scmp.eq.s32.totalorder %s21, 0
      %p247 = por %p245, %p246
      %p248 = scmp.ne.s32.totalorder %s237, %s240
      %p249 = scmp.eq.s32.totalorder %s26, 1
      %p250 = por %p248, %p249
      %p251 = scmp.ne.s32.totalorder %s240, %s241
      %p252 = scmp.eq.s32.totalorder %s26, 0
      %p253 = por %p251, %p252
      %p254 = scmp.ne.s32.totalorder %s240, %s241
      %p255 = scmp.eq.s32.totalorder %s27, 1
      %p256 = por %p254, %p255
      %p258 = scmp.ne.s32.totalorder %s241, %s257
      %p259 = scmp.eq.s32.totalorder %s27, 0
      %p260 = por %p258, %p259
      %p261 = scmp.le.s32.totalorder 1, %s21
      %p262 = scmp.lt.s32.totalorder %s21, 3
      %p263 = pnand %p261, %p262
      %p264 = pneg %p263
      // Predicated region
      $region9: #{tpu_custom_call.1} parent=5 // pred_check
        _
      $region10: #{tpu_custom_call.1} parent=5 // pred_check_branch
        %266 = sbr.rel (%p263) target = $region12
      $region11: #{tpu_custom_call.1} parent=5 // pred_region
        %s267 = ssub.s32 %s21, 1
        // Predicated region
        $region13: #{tpu_custom_call.1} parent=11 // pred_check
          %p268 = pneg %p134
        $region14: #{tpu_custom_call.1} parent=11 // pred_check_branch
          %270 = sbr.rel (%p268) target = $region16
        $region15: #{tpu_custom_call.1} parent=11 // pred_region
          _
        $region16: #{tpu_custom_call.1} parent=11 // pred_fallthru
          _
        // Predicated region
        $region17: #{tpu_custom_call.1} parent=11 // pred_check
          %p271 = pneg %p155
        $region18: #{tpu_custom_call.1} parent=11 // pred_check_branch
          %273 = sbr.rel (%p271) target = $region20
        $region19: #{tpu_custom_call.1} parent=11 // pred_region
          _
        $region20: #{tpu_custom_call.1} parent=11 // pred_fallthru
          _
        // Predicated region
        $region21: #{tpu_custom_call.1} parent=11 // pred_check
          %p274 = pneg %p176
        $region22: #{tpu_custom_call.1} parent=11 // pred_check_branch
          %276 = sbr.rel (%p274) target = $region24
        $region23: #{tpu_custom_call.1} parent=11 // pred_region
          _
        $region24: #{tpu_custom_call.1} parent=11 // pred_fallthru
          _
        // Predicated region
        $region25: #{tpu_custom_call.1} parent=11 // pred_check
          %p277 = pneg %p197
        $region26: #{tpu_custom_call.1} parent=11 // pred_check_branch
          %279 = sbr.rel (%p277) target = $region28
        $region27: #{tpu_custom_call.1} parent=11 // pred_region
          _
        $region28: #{tpu_custom_call.1} parent=11 // pred_fallthru
          _
      $region12: #{tpu_custom_call.1} parent=5 // pred_fallthru
        _
      %p280 = scmp.lt.s32.totalorder %s21, 2
      // Predicated region
      $region29: #{tpu_custom_call.1} parent=5 // pred_check
        %p281 = pneg %p280
      $region30: #{tpu_custom_call.1} parent=5 // pred_check_branch
        %283 = sbr.rel (%p281) target = $region32
      $region31: #{tpu_custom_call.1} parent=5 // pred_region
        // Predicated region
        $region33: #{tpu_custom_call.1} parent=31 // pred_check
          %p284 = pneg %p55
        $region34: #{tpu_custom_call.1} parent=31 // pred_check_branch
          %286 = sbr.rel (%p284) target = $region36
        $region35: #{tpu_custom_call.1} parent=31 // pred_region
          %p287 = scmp.lt.s32.totalorder %s28, 1
          %s288 = scalar_select %p287, %s28, 1
          %p289 = scmp.lt.s32.totalorder %s29, 0
          %s290 = scalar_select %p289, %s29, 0
          %s291 = sadd.s32 %s290, %s288
          %s292 = smul.addr %s291, 8
          %s293 = scalar_lea.vmem %s0, %s292
        $region36: #{tpu_custom_call.1} parent=31 // pred_fallthru
          _
        // Predicated region
        $region37: #{tpu_custom_call.1} parent=31 // pred_check
          %p294 = pneg %p81
        $region38: #{tpu_custom_call.1} parent=31 // pred_check_branch
          %296 = sbr.rel (%p294) target = $region40
        $region39: #{tpu_custom_call.1} parent=31 // pred_region
          %p297 = scmp.lt.s32.totalorder %s28, 1
          %s298 = scalar_select %p297, %s28, 1
          %s299 = smul.addr %s298, 8
          %s300 = scalar_lea.vmem %s1, %s299
        $region40: #{tpu_custom_call.1} parent=31 // pred_fallthru
          _
        // Predicated region
        $region41: #{tpu_custom_call.1} parent=31 // pred_check
          %p301 = pneg %p107
        $region42: #{tpu_custom_call.1} parent=31 // pred_check_branch
          %303 = sbr.rel (%p301) target = $region44
        $region43: #{tpu_custom_call.1} parent=31 // pred_region
          %p304 = scmp.lt.s32.totalorder %s28, 1
          %s305 = scalar_select %p304, %s28, 1
          %s306 = smul.addr %s305, 8
          %s307 = scalar_lea.vmem %s2, %s306
        $region44: #{tpu_custom_call.1} parent=31 // pred_fallthru
          _
      $region32: #{tpu_custom_call.1} parent=5 // pred_fallthru
        _
      %p308 = scmp.le.s32.totalorder 1, %s21
      %p309 = scmp.lt.s32.totalorder %s21, 3
      %p310 = pnand %p308, %p309
      %p311 = pneg %p310
      // Predicated region
      $region45: #{tpu_custom_call.1} parent=5 // pred_check
        _
      $region46: #{tpu_custom_call.1} parent=5 // pred_check_branch
        %313 = sbr.rel (%p310) target = $region48
      $region47: #{tpu_custom_call.1} parent=5 // pred_region
        %s314 = ssub.s32 %s21, 1
        %p315 = scmp.lt.s32.totalorder %s30, 1
        %s316 = scalar_select %p315, %s30, 1
        %p317 = scmp.lt.s32.totalorder %s31, 0
        %s318 = scalar_select %p317, %s31, 0
        %s319 = sadd.s32 %s318, %s316
        %s320 = smul.addr %s319, 8
        %s321 = scalar_lea.vmem %s0, %s320
        %p322 = pneg %p61
        %p323 = pneg %p58
        %p324 = scmp.lt.s32.totalorder %s30, 1
        %s325 = scalar_select %p324, %s30, 1
        %s326 = smul.addr %s325, 8
        %s327 = scalar_lea.vmem %s1, %s326
        %p328 = pneg %p87
        %p329 = pneg %p84
        %p330 = scmp.lt.s32.totalorder %s30, 1
        %s331 = scalar_select %p330, %s30, 1
        %s332 = smul.addr %s331, 8
        %s333 = scalar_lea.vmem %s2, %s332
        %p334 = pneg %p113
        %p335 = pneg %p110
        %p336 = pneg %p134
        %p337 = pneg %p131
        %p338 = pneg %p155
        %p339 = pneg %p152
        %p340 = pneg %p176
        %p341 = pneg %p173
        %p342 = pneg %p197
        %p343 = pneg %p194
        %p344 = pneg %p225
        %p345 = pneg %p222
        %s346 = sand.u32 %s212, 1
        %s347 = scalar_lea.sflag [#allocation3], %s346
        %s348 = sand.u32 %s212, 1
        %s349 = smul.addr %s348, 8
        %s350 = scalar_lea.vmem [#allocation2], %s349
        %p351 = pneg %p253
        %p352 = pneg %p250
        %s353 = sand.u32 %s240, 1
        %s354 = scalar_lea.sflag [#allocation5], %s353
        %s355 = sand.u32 %s240, 1
        %s356 = smul.addr %s355, 8
        %s357 = scalar_lea.vmem [#allocation4], %s356
        %p358 = scmp.lt.s32.totalorder %s30, 1
        %s359 = scalar_select %p358, %s30, 1
        %p360 = scmp.lt.s32.totalorder %s31, 0
        %s361 = scalar_select %p360, %s31, 0
        %s362 = sadd.s32 %s361, %s359
        %s363 = smul.addr %s362, 8
        %s364 = scalar_lea.vmem %s0, %s363
        %p365 = scmp.lt.s32.totalorder %s30, 1
        %s366 = scalar_select %p365, %s30, 1
        %s367 = smul.addr %s366, 8
        %s368 = scalar_lea.vmem %s1, %s367
        %p369 = scmp.lt.s32.totalorder %s30, 1
        %s370 = scalar_select %p369, %s30, 1
        %s371 = smul.addr %s370, 8
        %s372 = scalar_lea.vmem %s2, %s371
        %v373 = vld [vmem:[%s364] sm:$0xff]
        %v374 = vld [vmem:[%s368] sm:$0xff]
        %v375 = vld [vmem:[%s372] sm:$0xff]
        %v376 = vld [vmem:[%s3] sm:$0xff]
        %v377 = vld [vmem:[%s3 + $0x8] sm:$0xff]
        %v378 = vld [vmem:[%s3 + $0x10] sm:$0xff]
        %v379 = vld [vmem:[%s3 + $0x18] sm:$0xff]
        %v380 = vld [vmem:[%s4] sm:$0x1]
        %v382 = vlaneseq
        %v383 = vshrl.u32 %v382, 7
        %v384 = vsub.s32 0, %v383
        %v385 = vrot.slane %v380, %v384
        %vm387 = vcmask 261120
        %v389 = vsel %vm387, %v373, 0
        %391 = vmatprep.subr.mxu0 0.0
        %392 = vmatpush1.msra.mxu0 %v376
        %393 = vmatprep.subr.mxu0 0.0
        %394 = vmatpush1.msra.mxu0 %v377
        %395 = vmatprep.subr.mxu0 0.0
        %396 = vmatpush1.msra.mxu0 %v378
        %397 = vmatprep.subr.mxu0 0.0
        %398 = vmatpush1.msra.mxu0 %v379
        %399 = vmatprep.subr.mxu0 0.0
        %400 = vmatpush1.msra.mxu0 0.0
        %401 = vmatprep.subr.mxu0 0.0
        %402 = vmatpush1.msra.mxu0 0.0
        %403 = vmatprep.subr.mxu0 0.0
        %404 = vmatpush1.msra.mxu0 0.0
        %405 = vmatprep.subr.mxu0 0.0
        %406 = vmatpush1.msra.mxu0 0.0
        %407 = vmatprep.subr.mxu0 0.0
        %408 = vmatpush1.msra.mxu0 0.0
        %409 = vmatprep.subr.mxu0 0.0
        %410 = vmatpush1.msra.mxu0 0.0
        %411 = vmatprep.subr.mxu0 0.0
        %412 = vmatpush1.msra.mxu0 0.0
        %413 = vmatprep.subr.mxu0 0.0
        %414 = vmatpush1.msra.mxu0 0.0
        %415 = vmatprep.subr.mxu0 0.0
        %416 = vmatpush1.msra.mxu0 0.0
        %417 = vmatprep.subr.mxu0 0.0
        %418 = vmatpush1.msra.mxu0 0.0
        %419 = vmatprep.subr.mxu0 0.0
        %420 = vmatpush1.msra.mxu0 0.0
        %421 = vmatprep.subr.mxu0 0.0
        %422 = vmatpush1.msra.mxu0 0.0
        %423 = vmatprep.subr.mxu0 0.0
        %424 = vmatpush1.msra.mxu0 0.0
        %425 = vmatprep.subr.mxu0 0.0
        %426 = vmatpush1.msra.mxu0 0.0
        %427 = vmatprep.subr.mxu0 0.0
        %428 = vmatpush1.msra.mxu0 0.0
        %429 = vmatprep.subr.mxu0 0.0
        %430 = vmatpush1.msra.mxu0 0.0
        %431 = vmatprep.subr.mxu0 0.0
        %432 = vmatpush1.msra.mxu0 0.0
        %433 = vmatprep.subr.mxu0 0.0
        %434 = vmatpush1.msra.mxu0 0.0
        %435 = vmatprep.subr.mxu0 0.0
        %436 = vmatpush1.msra.mxu0 0.0
        %437 = vmatprep.subr.mxu0 0.0
        %438 = vmatpush1.msra.mxu0 0.0
        %439 = vmatprep.subr.mxu0 0.0
        %440 = vmatpush1.msra.mxu0 0.0
        %441 = vmatprep.subr.mxu0 0.0
        %442 = vmatpush1.msra.mxu0 0.0
        %443 = vmatprep.subr.mxu0 0.0
        %444 = vmatpush1.msra.mxu0 0.0
        %445 = vmatprep.subr.mxu0 0.0
        %446 = vmatpush1.msra.mxu0 0.0
        %447 = vmatprep.subr.mxu0 0.0
        %448 = vmatpush1.msra.mxu0 0.0
        %449 = vmatprep.subr.mxu0 0.0
        %450 = vmatpush1.msra.mxu0 0.0
        %451 = vmatprep.subr.mxu0 0.0
        %452 = vmatpush1.msra.mxu0 0.0
        %453 = vmatprep.subr.mxu0 0.0
        %454 = vmatpush1.msra.mxu0 0.0
        %455 = vmatprep.mubr.f32.mxu0 0.0
        %456 = vmatmul.mubr.f32.gmra.mrb[0].mxu0 %v389
        %v457 = vpop.f32.mrb[0].mxu0
        %v458 = vadd.f32 %v385, %v457
        %v459 = vpop.f32.mrb[0].mxu0
        %460 = vdwg.mxu0
        %s461 = scalar_lea.vmem %s3, 128
        %v462 = vld [vmem:[%s461] sm:$0xff]
        %v463 = vld [vmem:[%s461 + $0x8] sm:$0xff]
        %v464 = vld [vmem:[%s461 + $0x10] sm:$0xff]
        %v465 = vld [vmem:[%s461 + $0x18] sm:$0xff]
        %s466 = scalar_lea.vmem %s4, 4
        %v467 = vld [vmem:[%s466] sm:$0x1]
        %v469 = vlaneseq
        %v470 = vshrl.u32 %v469, 7
        %v471 = vsub.s32 0, %v470
        %v472 = vrot.slane %v467, %v471
        %v475 = vsel %vm387, %v374, 0
        %477 = vmatprep.subr.mxu0 0.0
        %478 = vmatpush1.msra.mxu0 %v462
        %479 = vmatprep.subr.mxu0 0.0
        %480 = vmatpush1.msra.mxu0 %v463
        %481 = vmatprep.subr.mxu0 0.0
        %482 = vmatpush1.msra.mxu0 %v464
        %483 = vmatprep.subr.mxu0 0.0
        %484 = vmatpush1.msra.mxu0 %v465
        %485 = vmatprep.subr.mxu0 0.0
        %486 = vmatpush1.msra.mxu0 0.0
        %487 = vmatprep.subr.mxu0 0.0
        %488 = vmatpush1.msra.mxu0 0.0
        %489 = vmatprep.subr.mxu0 0.0
        %490 = vmatpush1.msra.mxu0 0.0
        %491 = vmatprep.subr.mxu0 0.0
        %492 = vmatpush1.msra.mxu0 0.0
        %493 = vmatprep.subr.mxu0 0.0
        %494 = vmatpush1.msra.mxu0 0.0
        %495 = vmatprep.subr.mxu0 0.0
        %496 = vmatpush1.msra.mxu0 0.0
        %497 = vmatprep.subr.mxu0 0.0
        %498 = vmatpush1.msra.mxu0 0.0
        %499 = vmatprep.subr.mxu0 0.0
        %500 = vmatpush1.msra.mxu0 0.0
        %501 = vmatprep.subr.mxu0 0.0
        %502 = vmatpush1.msra.mxu0 0.0
        %503 = vmatprep.subr.mxu0 0.0
        %504 = vmatpush1.msra.mxu0 0.0
        %505 = vmatprep.subr.mxu0 0.0
        %506 = vmatpush1.msra.mxu0 0.0
        %507 = vmatprep.subr.mxu0 0.0
        %508 = vmatpush1.msra.mxu0 0.0
        %509 = vmatprep.subr.mxu0 0.0
        %510 = vmatpush1.msra.mxu0 0.0
        %511 = vmatprep.subr.mxu0 0.0
        %512 = vmatpush1.msra.mxu0 0.0
        %513 = vmatprep.subr.mxu0 0.0
        %514 = vmatpush1.msra.mxu0 0.0
        %515 = vmatprep.subr.mxu0 0.0
        %516 = vmatpush1.msra.mxu0 0.0
        %517 = vmatprep.subr.mxu0 0.0
        %518 = vmatpush1.msra.mxu0 0.0
        %519 = vmatprep.subr.mxu0 0.0
        %520 = vmatpush1.msra.mxu0 0.0
        %521 = vmatprep.subr.mxu0 0.0
        %522 = vmatpush1.msra.mxu0 0.0
        %523 = vmatprep.subr.mxu0 0.0
        %524 = vmatpush1.msra.mxu0 0.0
        %525 = vmatprep.subr.mxu0 0.0
        %526 = vmatpush1.msra.mxu0 0.0
        %527 = vmatprep.subr.mxu0 0.0
        %528 = vmatpush1.msra.mxu0 0.0
        %529 = vmatprep.subr.mxu0 0.0
        %530 = vmatpush1.msra.mxu0 0.0
        %531 = vmatprep.subr.mxu0 0.0
        %532 = vmatpush1.msra.mxu0 0.0
        %533 = vmatprep.subr.mxu0 0.0
        %534 = vmatpush1.msra.mxu0 0.0
        %535 = vmatprep.subr.mxu0 0.0
        %536 = vmatpush1.msra.mxu0 0.0
        %537 = vmatprep.subr.mxu0 0.0
        %538 = vmatpush1.msra.mxu0 0.0
        %539 = vmatprep.subr.mxu0 0.0
        %540 = vmatpush1.msra.mxu0 0.0
        %541 = vmatprep.mubr.f32.mxu0 0.0
        %542 = vmatmul.mubr.f32.gmra.mrb[0].mxu0 %v475
        %v543 = vpop.f32.mrb[0].mxu0
        %v544 = vadd.f32 %v472, %v543
        %v545 = vpop.f32.mrb[0].mxu0
        %546 = vdwg.mxu0
        %s547 = scalar_lea.vmem %s3, 256
        %v548 = vld [vmem:[%s547] sm:$0xff]
        %v549 = vld [vmem:[%s547 + $0x8] sm:$0xff]
        %v550 = vld [vmem:[%s547 + $0x10] sm:$0xff]
        %v551 = vld [vmem:[%s547 + $0x18] sm:$0xff]
        %s552 = scalar_lea.vmem %s4, 8
        %v553 = vld [vmem:[%s552] sm:$0x1]
        %v555 = vlaneseq
        %v556 = vshrl.u32 %v555, 7
        %v557 = vsub.s32 0, %v556
        %v558 = vrot.slane %v553, %v557
        %v561 = vsel %vm387, %v375, 0
        %563 = vmatprep.subr.mxu0 0.0
        %564 = vmatpush1.msra.mxu0 %v548
        %565 = vmatprep.subr.mxu0 0.0
        %566 = vmatpush1.msra.mxu0 %v549
        %567 = vmatprep.subr.mxu0 0.0
        %568 = vmatpush1.msra.mxu0 %v550
        %569 = vmatprep.subr.mxu0 0.0
        %570 = vmatpush1.msra.mxu0 %v551
        %571 = vmatprep.subr.mxu0 0.0
        %572 = vmatpush1.msra.mxu0 0.0
        %573 = vmatprep.subr.mxu0 0.0
        %574 = vmatpush1.msra.mxu0 0.0
        %575 = vmatprep.subr.mxu0 0.0
        %576 = vmatpush1.msra.mxu0 0.0
        %577 = vmatprep.subr.mxu0 0.0
        %578 = vmatpush1.msra.mxu0 0.0
        %579 = vmatprep.subr.mxu0 0.0
        %580 = vmatpush1.msra.mxu0 0.0
        %581 = vmatprep.subr.mxu0 0.0
        %582 = vmatpush1.msra.mxu0 0.0
        %583 = vmatprep.subr.mxu0 0.0
        %584 = vmatpush1.msra.mxu0 0.0
        %585 = vmatprep.subr.mxu0 0.0
        %586 = vmatpush1.msra.mxu0 0.0
        %587 = vmatprep.subr.mxu0 0.0
        %588 = vmatpush1.msra.mxu0 0.0
        %589 = vmatprep.subr.mxu0 0.0
        %590 = vmatpush1.msra.mxu0 0.0
        %591 = vmatprep.subr.mxu0 0.0
        %592 = vmatpush1.msra.mxu0 0.0
        %593 = vmatprep.subr.mxu0 0.0
        %594 = vmatpush1.msra.mxu0 0.0
        %595 = vmatprep.subr.mxu0 0.0
        %596 = vmatpush1.msra.mxu0 0.0
        %597 = vmatprep.subr.mxu0 0.0
        %598 = vmatpush1.msra.mxu0 0.0
        %599 = vmatprep.subr.mxu0 0.0
        %600 = vmatpush1.msra.mxu0 0.0
        %601 = vmatprep.subr.mxu0 0.0
        %602 = vmatpush1.msra.mxu0 0.0
        %603 = vmatprep.subr.mxu0 0.0
        %604 = vmatpush1.msra.mxu0 0.0
        %605 = vmatprep.subr.mxu0 0.0
        %606 = vmatpush1.msra.mxu0 0.0
        %607 = vmatprep.subr.mxu0 0.0
        %608 = vmatpush1.msra.mxu0 0.0
        %609 = vmatprep.subr.mxu0 0.0
        %610 = vmatpush1.msra.mxu0 0.0
        %611 = vmatprep.subr.mxu0 0.0
        %612 = vmatpush1.msra.mxu0 0.0
        %613 = vmatprep.subr.mxu0 0.0
        %614 = vmatpush1.msra.mxu0 0.0
        %615 = vmatprep.subr.mxu0 0.0
        %616 = vmatpush1.msra.mxu0 0.0
        %617 = vmatprep.subr.mxu0 0.0
        %618 = vmatpush1.msra.mxu0 0.0
        %619 = vmatprep.subr.mxu0 0.0
        %620 = vmatpush1.msra.mxu0 0.0
        %621 = vmatprep.subr.mxu0 0.0
        %622 = vmatpush1.msra.mxu0 0.0
        %623 = vmatprep.subr.mxu0 0.0
        %624 = vmatpush1.msra.mxu0 0.0
        %625 = vmatprep.subr.mxu0 0.0
        %626 = vmatpush1.msra.mxu0 0.0
        %627 = vmatprep.mubr.f32.mxu0 0.0
        %628 = vmatmul.mubr.f32.gmra.mrb[0].mxu0 %v561
        %v629 = vpop.f32.mrb[0].mxu0
        %v630 = vadd.f32 %v558, %v629
        %v631 = vpop.f32.mrb[0].mxu0
        %632 = vdwg.mxu0
        %vm633 = vcmask 64512
        %v635 = vsel %vm633, %v458, 0
        %v638 = vsel %vm633, %v544, 0
        %640 = vmatprep.subr.mxu0 0.0
        %641 = vmatpush1.xpose.msra.mxu0 %v638
        %642 = vmatprep.subr.mxu0 0.0
        %643 = vmatpush1.xpose.msra.mxu0 0.0
        %644 = vmatprep.subr.mxu0 0.0
        %645 = vmatpush1.xpose.msra.mxu0 0.0
        %646 = vmatprep.subr.mxu0 0.0
        %647 = vmatpush1.xpose.msra.mxu0 0.0
        %648 = vmatprep.subr.mxu0 0.0
        %649 = vmatpush1.xpose.msra.mxu0 0.0
        %650 = vmatprep.subr.mxu0 0.0
        %651 = vmatpush1.xpose.msra.mxu0 0.0
        %652 = vmatprep.subr.mxu0 0.0
        %653 = vmatpush1.xpose.msra.mxu0 0.0
        %654 = vmatprep.subr.mxu0 0.0
        %655 = vmatpush1.xpose.msra.mxu0 0.0
        %656 = vmatprep.subr.mxu0 0.0
        %657 = vmatpush1.xpose.msra.mxu0 0.0
        %658 = vmatprep.subr.mxu0 0.0
        %659 = vmatpush1.xpose.msra.mxu0 0.0
        %660 = vmatprep.subr.mxu0 0.0
        %661 = vmatpush1.xpose.msra.mxu0 0.0
        %662 = vmatprep.subr.mxu0 0.0
        %663 = vmatpush1.xpose.msra.mxu0 0.0
        %664 = vmatprep.subr.mxu0 0.0
        %665 = vmatpush1.xpose.msra.mxu0 0.0
        %666 = vmatprep.subr.mxu0 0.0
        %667 = vmatpush1.xpose.msra.mxu0 0.0
        %668 = vmatprep.subr.mxu0 0.0
        %669 = vmatpush1.xpose.msra.mxu0 0.0
        %670 = vmatprep.subr.mxu0 0.0
        %671 = vmatpush1.xpose.msra.mxu0 0.0
        %672 = vmatprep.subr.mxu0 0.0
        %673 = vmatpush1.xpose.msra.mxu0 0.0
        %674 = vmatprep.subr.mxu0 0.0
        %675 = vmatpush1.xpose.msra.mxu0 0.0
        %676 = vmatprep.subr.mxu0 0.0
        %677 = vmatpush1.xpose.msra.mxu0 0.0
        %678 = vmatprep.subr.mxu0 0.0
        %679 = vmatpush1.xpose.msra.mxu0 0.0
        %680 = vmatprep.subr.mxu0 0.0
        %681 = vmatpush1.xpose.msra.mxu0 0.0
        %682 = vmatprep.subr.mxu0 0.0
        %683 = vmatpush1.xpose.msra.mxu0 0.0
        %684 = vmatprep.subr.mxu0 0.0
        %685 = vmatpush1.xpose.msra.mxu0 0.0
        %686 = vmatprep.subr.mxu0 0.0
        %687 = vmatpush1.xpose.msra.mxu0 0.0
        %688 = vmatprep.subr.mxu0 0.0
        %689 = vmatpush1.xpose.msra.mxu0 0.0
        %690 = vmatprep.subr.mxu0 0.0
        %691 = vmatpush1.xpose.msra.mxu0 0.0
        %692 = vmatprep.subr.mxu0 0.0
        %693 = vmatpush1.xpose.msra.mxu0 0.0
        %694 = vmatprep.subr.mxu0 0.0
        %695 = vmatpush1.xpose.msra.mxu0 0.0
        %696 = vmatprep.subr.mxu0 0.0
        %697 = vmatpush1.xpose.msra.mxu0 0.0
        %698 = vmatprep.subr.mxu0 0.0
        %699 = vmatpush1.xpose.msra.mxu0 0.0
        %700 = vmatprep.subr.mxu0 0.0
        %701 = vmatpush1.xpose.msra.mxu0 0.0
        %702 = vmatprep.subr.mxu0 0.0
        %703 = vmatpush1.xpose.msra.mxu0 0.0
        %704 = vmatprep.mubr.f32.mxu0 0.0
        %705 = vmatmul.mubr.f32.gmra.mrb[0].mxu0 %v635
        %v706 = vpop.f32.mrb[0].mxu0
        %v707 = vadd.f32 0.0, %v706
        %v708 = vpop.f32.mrb[0].mxu0
        %709 = vdwg.mxu0
        %v710 = vsel %vm633, %v707, -inf
        %711 = vmax.xlane.f32.xlu0 %v710
        %v712 = vpop.xlane.xlu0 %711
        %v713 = vsub.f32 %v707, %v712
        %v714 = vmul.f32 %v713, 1.442695
        %v715 = vpow.pop %v714
        %v716 = vsel %vm633, %v715, 0.0
        %717 = vadd.xlane.f32.xlu0 %v716
        %v718 = vpop.xlane.xlu0 %717
        %v719 = vrcp.pop %v718
        %v720 = vmul.f32 %v715, %v719
        %v721 = vadd.f32 %v720, 0.0
        %v723 = vsel %vm633, %v720, 0
        %725 = vmatprep.subr.mxu0 0.0
        %726 = vmatpush1.msra.mxu0 %v630
        %727 = vmatprep.subr.mxu0 0.0
        %728 = vmatpush1.msra.mxu0 0.0
        %729 = vmatprep.subr.mxu0 0.0
        %730 = vmatpush1.msra.mxu0 0.0
        %731 = vmatprep.subr.mxu0 0.0
        %732 = vmatpush1.msra.mxu0 0.0
        %733 = vmatprep.subr.mxu0 0.0
        %734 = vmatpush1.msra.mxu0 0.0
        %735 = vmatprep.subr.mxu0 0.0
        %736 = vmatpush1.msra.mxu0 0.0
        %737 = vmatprep.subr.mxu0 0.0
        %738 = vmatpush1.msra.mxu0 0.0
        %739 = vmatprep.subr.mxu0 0.0
        %740 = vmatpush1.msra.mxu0 0.0
        %741 = vmatprep.subr.mxu0 0.0
        %742 = vmatpush1.msra.mxu0 0.0
        %743 = vmatprep.subr.mxu0 0.0
        %744 = vmatpush1.msra.mxu0 0.0
        %745 = vmatprep.subr.mxu0 0.0
        %746 = vmatpush1.msra.mxu0 0.0
        %747 = vmatprep.subr.mxu0 0.0
        %748 = vmatpush1.msra.mxu0 0.0
        %749 = vmatprep.subr.mxu0 0.0
        %750 = vmatpush1.msra.mxu0 0.0
        %751 = vmatprep.subr.mxu0 0.0
        %752 = vmatpush1.msra.mxu0 0.0
        %753 = vmatprep.subr.mxu0 0.0
        %754 = vmatpush1.msra.mxu0 0.0
        %755 = vmatprep.subr.mxu0 0.0
        %756 = vmatpush1.msra.mxu0 0.0
        %757 = vmatprep.subr.mxu0 0.0
        %758 = vmatpush1.msra.mxu0 0.0
        %759 = vmatprep.subr.mxu0 0.0
        %760 = vmatpush1.msra.mxu0 0.0
        %761 = vmatprep.subr.mxu0 0.0
        %762 = vmatpush1.msra.mxu0 0.0
        %763 = vmatprep.subr.mxu0 0.0
        %764 = vmatpush1.msra.mxu0 0.0
        %765 = vmatprep.subr.mxu0 0.0
        %766 = vmatpush1.msra.mxu0 0.0
        %767 = vmatprep.subr.mxu0 0.0
        %768 = vmatpush1.msra.mxu0 0.0
        %769 = vmatprep.subr.mxu0 0.0
        %770 = vmatpush1.msra.mxu0 0.0
        %771 = vmatprep.subr.mxu0 0.0
        %772 = vmatpush1.msra.mxu0 0.0
        %773 = vmatprep.subr.mxu0 0.0
        %774 = vmatpush1.msra.mxu0 0.0
        %775 = vmatprep.subr.mxu0 0.0
        %776 = vmatpush1.msra.mxu0 0.0
        %777 = vmatprep.subr.mxu0 0.0
        %778 = vmatpush1.msra.mxu0 0.0
        %779 = vmatprep.subr.mxu0 0.0
        %780 = vmatpush1.msra.mxu0 0.0
        %781 = vmatprep.subr.mxu0 0.0
        %782 = vmatpush1.msra.mxu0 0.0
        %783 = vmatprep.subr.mxu0 0.0
        %784 = vmatpush1.msra.mxu0 0.0
        %785 = vmatprep.subr.mxu0 0.0
        %786 = vmatpush1.msra.mxu0 0.0
        %787 = vmatprep.subr.mxu0 0.0
        %788 = vmatpush1.msra.mxu0 0.0
        %789 = vmatprep.mubr.f32.mxu0 0.0
        %790 = vmatmul.mubr.f32.gmra.mrb[0].mxu0 %v723
        %v791 = vpop.f32.mrb[0].mxu0
        %v792 = vadd.f32 0.0, %v791
        %v793 = vpop.f32.mrb[0].mxu0
        %794 = vdwg.mxu0
        %v795 = vld [vmem:[%s5] sm:$0xff]
        %s796 = scalar_lea.vmem %s3, 32
        %v797 = vld [vmem:[%s796] sm:$0xff]
        %v798 = vld [vmem:[%s796 + $0x8] sm:$0xff]
        %v799 = vld [vmem:[%s796 + $0x10] sm:$0xff]
        %v800 = vld [vmem:[%s796 + $0x18] sm:$0xff]
        %s801 = scalar_lea.vmem %s4, 1
        %v802 = vld [vmem:[%s801] sm:$0x1]
        %v804 = vlaneseq
        %v805 = vshrl.u32 %v804, 7
        %v806 = vsub.s32 0, %v805
        %v807 = vrot.slane %v802, %v806
        %809 = vmatprep.subr.mxu0 0.0
        %810 = vmatpush1.msra.mxu0 %v797
        %811 = vmatprep.subr.mxu0 0.0
        %812 = vmatpush1.msra.mxu0 %v798
        %813 = vmatprep.subr.mxu0 0.0
        %814 = vmatpush1.msra.mxu0 %v799
        %815 = vmatprep.subr.mxu0 0.0
        %816 = vmatpush1.msra.mxu0 %v800
        %817 = vmatprep.subr.mxu0 0.0
        %818 = vmatpush1.msra.mxu0 0.0
        %819 = vmatprep.subr.mxu0 0.0
        %820 = vmatpush1.msra.mxu0 0.0
        %821 = vmatprep.subr.mxu0 0.0
        %822 = vmatpush1.msra.mxu0 0.0
        %823 = vmatprep.subr.mxu0 0.0
        %824 = vmatpush1.msra.mxu0 0.0
        %825 = vmatprep.subr.mxu0 0.0
        %826 = vmatpush1.msra.mxu0 0.0
        %827 = vmatprep.subr.mxu0 0.0
        %828 = vmatpush1.msra.mxu0 0.0
        %829 = vmatprep.subr.mxu0 0.0
        %830 = vmatpush1.msra.mxu0 0.0
        %831 = vmatprep.subr.mxu0 0.0
        %832 = vmatpush1.msra.mxu0 0.0
        %833 = vmatprep.subr.mxu0 0.0
        %834 = vmatpush1.msra.mxu0 0.0
        %835 = vmatprep.subr.mxu0 0.0
        %836 = vmatpush1.msra.mxu0 0.0
        %837 = vmatprep.subr.mxu0 0.0
        %838 = vmatpush1.msra.mxu0 0.0
        %839 = vmatprep.subr.mxu0 0.0
        %840 = vmatpush1.msra.mxu0 0.0
        %841 = vmatprep.subr.mxu0 0.0
        %842 = vmatpush1.msra.mxu0 0.0
        %843 = vmatprep.subr.mxu0 0.0
        %844 = vmatpush1.msra.mxu0 0.0
        %845 = vmatprep.subr.mxu0 0.0
        %846 = vmatpush1.msra.mxu0 0.0
        %847 = vmatprep.subr.mxu0 0.0
        %848 = vmatpush1.msra.mxu0 0.0
        %849 = vmatprep.subr.mxu0 0.0
        %850 = vmatpush1.msra.mxu0 0.0
        %851 = vmatprep.subr.mxu0 0.0
        %852 = vmatpush1.msra.mxu0 0.0
        %853 = vmatprep.subr.mxu0 0.0
        %854 = vmatpush1.msra.mxu0 0.0
        %855 = vmatprep.subr.mxu0 0.0
        %856 = vmatpush1.msra.mxu0 0.0
        %857 = vmatprep.subr.mxu0 0.0
        %858 = vmatpush1.msra.mxu0 0.0
        %859 = vmatprep.subr.mxu0 0.0
        %860 = vmatpush1.msra.mxu0 0.0
        %861 = vmatprep.subr.mxu0 0.0
        %862 = vmatpush1.msra.mxu0 0.0
        %863 = vmatprep.subr.mxu0 0.0
        %864 = vmatpush1.msra.mxu0 0.0
        %865 = vmatprep.subr.mxu0 0.0
        %866 = vmatpush1.msra.mxu0 0.0
        %867 = vmatprep.subr.mxu0 0.0
        %868 = vmatpush1.msra.mxu0 0.0
        %869 = vmatprep.subr.mxu0 0.0
        %870 = vmatpush1.msra.mxu0 0.0
        %871 = vmatprep.subr.mxu0 0.0
        %872 = vmatpush1.msra.mxu0 0.0
        %873 = vmatprep.mubr.f32.mxu0 0.0
        %874 = vmatmul.mubr.f32.gmra.mrb[0].mxu0 %v389
        %v875 = vpop.f32.mrb[0].mxu0
        %v876 = vadd.f32 %v807, %v875
        %v877 = vpop.f32.mrb[0].mxu0
        %878 = vdwg.mxu0
        %s879 = scalar_lea.vmem %s3, 160
        %v880 = vld [vmem:[%s879] sm:$0xff]
        %v881 = vld [vmem:[%s879 + $0x8] sm:$0xff]
        %v882 = vld [vmem:[%s879 + $0x10] sm:$0xff]
        %v883 = vld [vmem:[%s879 + $0x18] sm:$0xff]
        %s884 = scalar_lea.vmem %s4, 5
        %v885 = vld [vmem:[%s884] sm:$0x1]
        %v887 = vlaneseq
        %v888 = vshrl.u32 %v887, 7
        %v889 = vsub.s32 0, %v888
        %v890 = vrot.slane %v885, %v889
        %892 = vmatprep.subr.mxu0 0.0
        %893 = vmatpush1.msra.mxu0 %v880
        %894 = vmatprep.subr.mxu0 0.0
        %895 = vmatpush1.msra.mxu0 %v881
        %896 = vmatprep.subr.mxu0 0.0
        %897 = vmatpush1.msra.mxu0 %v882
        %898 = vmatprep.subr.mxu0 0.0
        %899 = vmatpush1.msra.mxu0 %v883
        %900 = vmatprep.subr.mxu0 0.0
        %901 = vmatpush1.msra.mxu0 0.0
        %902 = vmatprep.subr.mxu0 0.0
        %903 = vmatpush1.msra.mxu0 0.0
        %904 = vmatprep.subr.mxu0 0.0
        %905 = vmatpush1.msra.mxu0 0.0
        %906 = vmatprep.subr.mxu0 0.0
        %907 = vmatpush1.msra.mxu0 0.0
        %908 = vmatprep.subr.mxu0 0.0
        %909 = vmatpush1.msra.mxu0 0.0
        %910 = vmatprep.subr.mxu0 0.0
        %911 = vmatpush1.msra.mxu0 0.0
        %912 = vmatprep.subr.mxu0 0.0
        %913 = vmatpush1.msra.mxu0 0.0
        %914 = vmatprep.subr.mxu0 0.0
        %915 = vmatpush1.msra.mxu0 0.0
        %916 = vmatprep.subr.mxu0 0.0
        %917 = vmatpush1.msra.mxu0 0.0
        %918 = vmatprep.subr.mxu0 0.0
        %919 = vmatpush1.msra.mxu0 0.0
        %920 = vmatprep.subr.mxu0 0.0
        %921 = vmatpush1.msra.mxu0 0.0
        %922 = vmatprep.subr.mxu0 0.0
        %923 = vmatpush1.msra.mxu0 0.0
        %924 = vmatprep.subr.mxu0 0.0
        %925 = vmatpush1.msra.mxu0 0.0
        %926 = vmatprep.subr.mxu0 0.0
        %927 = vmatpush1.msra.mxu0 0.0
        %928 = vmatprep.subr.mxu0 0.0
        %929 = vmatpush1.msra.mxu0 0.0
        %930 = vmatprep.subr.mxu0 0.0
        %931 = vmatpush1.msra.mxu0 0.0
        %932 = vmatprep.subr.mxu0 0.0
        %933 = vmatpush1.msra.mxu0 0.0
        %934 = vmatprep.subr.mxu0 0.0
        %935 = vmatpush1.msra.mxu0 0.0
        %936 = vmatprep.subr.mxu0 0.0
        %937 = vmatpush1.msra.mxu0 0.0
        %938 = vmatprep.subr.mxu0 0.0
        %939 = vmatpush1.msra.mxu0 0.0
        %940 = vmatprep.subr.mxu0 0.0
        %941 = vmatpush1.msra.mxu0 0.0
        %942 = vmatprep.subr.mxu0 0.0
        %943 = vmatpush1.msra.mxu0 0.0
        %944 = vmatprep.subr.mxu0 0.0
        %945 = vmatpush1.msra.mxu0 0.0
        %946 = vmatprep.subr.mxu0 0.0
        %947 = vmatpush1.msra.mxu0 0.0
        %948 = vmatprep.subr.mxu0 0.0
        %949 = vmatpush1.msra.mxu0 0.0
        %950 = vmatprep.subr.mxu0 0.0
        %951 = vmatpush1.msra.mxu0 0.0
        %952 = vmatprep.subr.mxu0 0.0
        %953 = vmatpush1.msra.mxu0 0.0
        %954 = vmatprep.subr.mxu0 0.0
        %955 = vmatpush1.msra.mxu0 0.0
        %956 = vmatprep.mubr.f32.mxu0 0.0
        %957 = vmatmul.mubr.f32.gmra.mrb[0].mxu0 %v475
        %v958 = vpop.f32.mrb[0].mxu0
        %v959 = vadd.f32 %v890, %v958
        %v960 = vpop.f32.mrb[0].mxu0
        %961 = vdwg.mxu0
        %s962 = scalar_lea.vmem %s3, 288
        %v963 = vld [vmem:[%s962] sm:$0xff]
        %v964 = vld [vmem:[%s962 + $0x8] sm:$0xff]
        %v965 = vld [vmem:[%s962 + $0x10] sm:$0xff]
        %v966 = vld [vmem:[%s962 + $0x18] sm:$0xff]
        %s967 = scalar_lea.vmem %s4, 9
        %v968 = vld [vmem:[%s967] sm:$0x1]
        %v970 = vlaneseq
        %v971 = vshrl.u32 %v970, 7
        %v972 = vsub.s32 0, %v971
        %v973 = vrot.slane %v968, %v972
        %975 = vmatprep.subr.mxu0 0.0
        %976 = vmatpush1.msra.mxu0 %v963
        %977 = vmatprep.subr.mxu0 0.0
        %978 = vmatpush1.msra.mxu0 %v964
        %979 = vmatprep.subr.mxu0 0.0
        %980 = vmatpush1.msra.mxu0 %v965
        %981 = vmatprep.subr.mxu0 0.0
        %982 = vmatpush1.msra.mxu0 %v966
        %983 = vmatprep.subr.mxu0 0.0
        %984 = vmatpush1.msra.mxu0 0.0
        %985 = vmatprep.subr.mxu0 0.0
        %986 = vmatpush1.msra.mxu0 0.0
        %987 = vmatprep.subr.mxu0 0.0
        %988 = vmatpush1.msra.mxu0 0.0
        %989 = vmatprep.subr.mxu0 0.0
        %990 = vmatpush1.msra.mxu0 0.0
        %991 = vmatprep.subr.mxu0 0.0
        %992 = vmatpush1.msra.mxu0 0.0
        %993 = vmatprep.subr.mxu0 0.0
        %994 = vmatpush1.msra.mxu0 0.0
        %995 = vmatprep.subr.mxu0 0.0
        %996 = vmatpush1.msra.mxu0 0.0
        %997 = vmatprep.subr.mxu0 0.0
        %998 = vmatpush1.msra.mxu0 0.0
        %999 = vmatprep.subr.mxu0 0.0
        %1000 = vmatpush1.msra.mxu0 0.0
        %1001 = vmatprep.subr.mxu0 0.0
        %1002 = vmatpush1.msra.mxu0 0.0
        %1003 = vmatprep.subr.mxu0 0.0
        %1004 = vmatpush1.msra.mxu0 0.0
        %1005 = vmatprep.subr.mxu0 0.0
        %1006 = vmatpush1.msra.mxu0 0.0
        %1007 = vmatprep.subr.mxu0 0.0
        %1008 = vmatpush1.msra.mxu0 0.0
        %1009 = vmatprep.subr.mxu0 0.0
        %1010 = vmatpush1.msra.mxu0 0.0
        %1011 = vmatprep.subr.mxu0 0.0
        %1012 = vmatpush1.msra.mxu0 0.0
        %1013 = vmatprep.subr.mxu0 0.0
        %1014 = vmatpush1.msra.mxu0 0.0
        %1015 = vmatprep.subr.mxu0 0.0
        %1016 = vmatpush1.msra.mxu0 0.0
        %1017 = vmatprep.subr.mxu0 0.0
        %1018 = vmatpush1.msra.mxu0 0.0
        %1019 = vmatprep.subr.mxu0 0.0
        %1020 = vmatpush1.msra.mxu0 0.0
        %1021 = vmatprep.subr.mxu0 0.0
        %1022 = vmatpush1.msra.mxu0 0.0
        %1023 = vmatprep.subr.mxu0 0.0
        %1024 = vmatpush1.msra.mxu0 0.0
        %1025 = vmatprep.subr.mxu0 0.0
        %1026 = vmatpush1.msra.mxu0 0.0
        %1027 = vmatprep.subr.mxu0 0.0
        %1028 = vmatpush1.msra.mxu0 0.0
        %1029 = vmatprep.subr.mxu0 0.0
        %1030 = vmatpush1.msra.mxu0 0.0
        %1031 = vmatprep.subr.mxu0 0.0
        %1032 = vmatpush1.msra.mxu0 0.0
        %1033 = vmatprep.subr.mxu0 0.0
        %1034 = vmatpush1.msra.mxu0 0.0
        %1035 = vmatprep.subr.mxu0 0.0
        %1036 = vmatpush1.msra.mxu0 0.0
        %1037 = vmatprep.subr.mxu0 0.0
        %1038 = vmatpush1.msra.mxu0 0.0
        %1039 = vmatprep.mubr.f32.mxu0 0.0
        %1040 = vmatmul.mubr.f32.gmra.mrb[0].mxu0 %v561
        %v1041 = vpop.f32.mrb[0].mxu0
        %v1042 = vadd.f32 %v973, %v1041
        %v1043 = vpop.f32.mrb[0].mxu0
        %1044 = vdwg.mxu0
        %v1046 = vsel %vm633, %v876, 0
        %v1049 = vsel %vm633, %v959, 0
        %1051 = vmatprep.subr.mxu0 0.0
        %1052 = vmatpush1.xpose.msra.mxu0 %v1049
        %1053 = vmatprep.subr.mxu0 0.0
        %1054 = vmatpush1.xpose.msra.mxu0 0.0
        %1055 = vmatprep.subr.mxu0 0.0
        %1056 = vmatpush1.xpose.msra.mxu0 0.0
        %1057 = vmatprep.subr.mxu0 0.0
        %1058 = vmatpush1.xpose.msra.mxu0 0.0
        %1059 = vmatprep.subr.mxu0 0.0
        %1060 = vmatpush1.xpose.msra.mxu0 0.0
        %1061 = vmatprep.subr.mxu0 0.0
        %1062 = vmatpush1.xpose.msra.mxu0 0.0
        %1063 = vmatprep.subr.mxu0 0.0
        %1064 = vmatpush1.xpose.msra.mxu0 0.0
        %1065 = vmatprep.subr.mxu0 0.0
        %1066 = vmatpush1.xpose.msra.mxu0 0.0
        %1067 = vmatprep.subr.mxu0 0.0
        %1068 = vmatpush1.xpose.msra.mxu0 0.0
        %1069 = vmatprep.subr.mxu0 0.0
        %1070 = vmatpush1.xpose.msra.mxu0 0.0
        %1071 = vmatprep.subr.mxu0 0.0
        %1072 = vmatpush1.xpose.msra.mxu0 0.0
        %1073 = vmatprep.subr.mxu0 0.0
        %1074 = vmatpush1.xpose.msra.mxu0 0.0
        %1075 = vmatprep.subr.mxu0 0.0
        %1076 = vmatpush1.xpose.msra.mxu0 0.0
        %1077 = vmatprep.subr.mxu0 0.0
        %1078 = vmatpush1.xpose.msra.mxu0 0.0
        %1079 = vmatprep.subr.mxu0 0.0
        %1080 = vmatpush1.xpose.msra.mxu0 0.0
        %1081 = vmatprep.subr.mxu0 0.0
        %1082 = vmatpush1.xpose.msra.mxu0 0.0
        %1083 = vmatprep.subr.mxu0 0.0
        %1084 = vmatpush1.xpose.msra.mxu0 0.0
        %1085 = vmatprep.subr.mxu0 0.0
        %1086 = vmatpush1.xpose.msra.mxu0 0.0
        %1087 = vmatprep.subr.mxu0 0.0
        %1088 = vmatpush1.xpose.msra.mxu0 0.0
        %1089 = vmatprep.subr.mxu0 0.0
        %1090 = vmatpush1.xpose.msra.mxu0 0.0
        %1091 = vmatprep.subr.mxu0 0.0
        %1092 = vmatpush1.xpose.msra.mxu0 0.0
        %1093 = vmatprep.subr.mxu0 0.0
        %1094 = vmatpush1.xpose.msra.mxu0 0.0
        %1095 = vmatprep.subr.mxu0 0.0
        %1096 = vmatpush1.xpose.msra.mxu0 0.0
        %1097 = vmatprep.subr.mxu0 0.0
        %1098 = vmatpush1.xpose.msra.mxu0 0.0
        %1099 = vmatprep.subr.mxu0 0.0
        %1100 = vmatpush1.xpose.msra.mxu0 0.0
        %1101 = vmatprep.subr.mxu0 0.0
        %1102 = vmatpush1.xpose.msra.mxu0 0.0
        %1103 = vmatprep.subr.mxu0 0.0
        %1104 = vmatpush1.xpose.msra.mxu0 0.0
        %1105 = vmatprep.subr.mxu0 0.0
        %1106 = vmatpush1.xpose.msra.mxu0 0.0
        %1107 = vmatprep.subr.mxu0 0.0
        %1108 = vmatpush1.xpose.msra.mxu0 0.0
        %1109 = vmatprep.subr.mxu0 0.0
        %1110 = vmatpush1.xpose.msra.mxu0 0.0
        %1111 = vmatprep.subr.mxu0 0.0
        %1112 = vmatpush1.xpose.msra.mxu0 0.0
        %1113 = vmatprep.subr.mxu0 0.0
        %1114 = vmatpush1.xpose.msra.mxu0 0.0
        %1115 = vmatprep.mubr.f32.mxu0 0.0
        %1116 = vmatmul.mubr.f32.gmra.mrb[0].mxu0 %v1046
        %v1117 = vpop.f32.mrb[0].mxu0
        %v1118 = vadd.f32 0.0, %v1117
        %v1119 = vpop.f32.mrb[0].mxu0
        %1120 = vdwg.mxu0
        %v1121 = vsel %vm633, %v1118, -inf
        %1122 = vmax.xlane.f32.xlu0 %v1121
        %v1123 = vpop.xlane.xlu0 %1122
        %v1124 = vsub.f32 %v1118, %v1123
        %v1125 = vmul.f32 %v1124, 1.442695
        %v1126 = vpow.pop %v1125
        %v1127 = vsel %vm633, %v1126, 0.0
        %1128 = vadd.xlane.f32.xlu0 %v1127
        %v1129 = vpop.xlane.xlu0 %1128
        %v1130 = vrcp.pop %v1129
        %v1131 = vmul.f32 %v1126, %v1130
        %v1132 = vadd.f32 %v721, %v1131
        %v1134 = vsel %vm633, %v1131, 0
        %1136 = vmatprep.subr.mxu0 0.0
        %1137 = vmatpush1.msra.mxu0 %v1042
        %1138 = vmatprep.subr.mxu0 0.0
        %1139 = vmatpush1.msra.mxu0 0.0
        %1140 = vmatprep.subr.mxu0 0.0
        %1141 = vmatpush1.msra.mxu0 0.0
        %1142 = vmatprep.subr.mxu0 0.0
        %1143 = vmatpush1.msra.mxu0 0.0
        %1144 = vmatprep.subr.mxu0 0.0
        %1145 = vmatpush1.msra.mxu0 0.0
        %1146 = vmatprep.subr.mxu0 0.0
        %1147 = vmatpush1.msra.mxu0 0.0
        %1148 = vmatprep.subr.mxu0 0.0
        %1149 = vmatpush1.msra.mxu0 0.0
        %1150 = vmatprep.subr.mxu0 0.0
        %1151 = vmatpush1.msra.mxu0 0.0
        %1152 = vmatprep.subr.mxu0 0.0
        %1153 = vmatpush1.msra.mxu0 0.0
        %1154 = vmatprep.subr.mxu0 0.0
        %1155 = vmatpush1.msra.mxu0 0.0
        %1156 = vmatprep.subr.mxu0 0.0
        %1157 = vmatpush1.msra.mxu0 0.0
        %1158 = vmatprep.subr.mxu0 0.0
        %1159 = vmatpush1.msra.mxu0 0.0
        %1160 = vmatprep.subr.mxu0 0.0
        %1161 = vmatpush1.msra.mxu0 0.0
        %1162 = vmatprep.subr.mxu0 0.0
        %1163 = vmatpush1.msra.mxu0 0.0
        %1164 = vmatprep.subr.mxu0 0.0
        %1165 = vmatpush1.msra.mxu0 0.0
        %1166 = vmatprep.subr.mxu0 0.0
        %1167 = vmatpush1.msra.mxu0 0.0
        %1168 = vmatprep.subr.mxu0 0.0
        %1169 = vmatpush1.msra.mxu0 0.0
        %1170 = vmatprep.subr.mxu0 0.0
        %1171 = vmatpush1.msra.mxu0 0.0
        %1172 = vmatprep.subr.mxu0 0.0
        %1173 = vmatpush1.msra.mxu0 0.0
        %1174 = vmatprep.subr.mxu0 0.0
        %1175 = vmatpush1.msra.mxu0 0.0
        %1176 = vmatprep.subr.mxu0 0.0
        %1177 = vmatpush1.msra.mxu0 0.0
        %1178 = vmatprep.subr.mxu0 0.0
        %1179 = vmatpush1.msra.mxu0 0.0
        %1180 = vmatprep.subr.mxu0 0.0
        %1181 = vmatpush1.msra.mxu0 0.0
        %1182 = vmatprep.subr.mxu0 0.0
        %1183 = vmatpush1.msra.mxu0 0.0
        %1184 = vmatprep.subr.mxu0 0.0
        %1185 = vmatpush1.msra.mxu0 0.0
        %1186 = vmatprep.subr.mxu0 0.0
        %1187 = vmatpush1.msra.mxu0 0.0
        %1188 = vmatprep.subr.mxu0 0.0
        %1189 = vmatpush1.msra.mxu0 0.0
        %1190 = vmatprep.subr.mxu0 0.0
        %1191 = vmatpush1.msra.mxu0 0.0
        %1192 = vmatprep.subr.mxu0 0.0
        %1193 = vmatpush1.msra.mxu0 0.0
        %1194 = vmatprep.subr.mxu0 0.0
        %1195 = vmatpush1.msra.mxu0 0.0
        %1196 = vmatprep.subr.mxu0 0.0
        %1197 = vmatpush1.msra.mxu0 0.0
        %1198 = vmatprep.subr.mxu0 0.0
        %1199 = vmatpush1.msra.mxu0 0.0
        %1200 = vmatprep.mubr.f32.mxu0 0.0
        %1201 = vmatmul.mubr.f32.gmra.mrb[0].mxu0 %v1134
        %v1202 = vpop.f32.mrb[0].mxu0
        %v1203 = vadd.f32 0.0, %v1202
        %v1204 = vpop.f32.mrb[0].mxu0
        %1205 = vdwg.mxu0
        %s1206 = scalar_lea.vmem %s5, 8
        %v1207 = vld [vmem:[%s1206] sm:$0xff]
        %v1209 = vsel %vm633, %v1203, 0
        %1211 = vmatprep.subr.mxu0 0.0
        %1212 = vmatpush1.msra.mxu0 %v1207
        %1213 = vmatprep.subr.mxu0 0.0
        %1214 = vmatpush1.msra.mxu0 0.0
        %1215 = vmatprep.subr.mxu0 0.0
        %1216 = vmatpush1.msra.mxu0 0.0
        %1217 = vmatprep.subr.mxu0 0.0
        %1218 = vmatpush1.msra.mxu0 0.0
        %1219 = vmatprep.subr.mxu0 0.0
        %1220 = vmatpush1.msra.mxu0 0.0
        %1221 = vmatprep.subr.mxu0 0.0
        %1222 = vmatpush1.msra.mxu0 0.0
        %1223 = vmatprep.subr.mxu0 0.0
        %1224 = vmatpush1.msra.mxu0 0.0
        %1225 = vmatprep.subr.mxu0 0.0
        %1226 = vmatpush1.msra.mxu0 0.0
        %1227 = vmatprep.subr.mxu0 0.0
        %1228 = vmatpush1.msra.mxu0 0.0
        %1229 = vmatprep.subr.mxu0 0.0
        %1230 = vmatpush1.msra.mxu0 0.0
        %1231 = vmatprep.subr.mxu0 0.0
        %1232 = vmatpush1.msra.mxu0 0.0
        %1233 = vmatprep.subr.mxu0 0.0
        %1234 = vmatpush1.msra.mxu0 0.0
        %1235 = vmatprep.subr.mxu0 0.0
        %1236 = vmatpush1.msra.mxu0 0.0
        %1237 = vmatprep.subr.mxu0 0.0
        %1238 = vmatpush1.msra.mxu0 0.0
        %1239 = vmatprep.subr.mxu0 0.0
        %1240 = vmatpush1.msra.mxu0 0.0
        %1241 = vmatprep.subr.mxu0 0.0
        %1242 = vmatpush1.msra.mxu0 0.0
        %1243 = vmatprep.subr.mxu0 0.0
        %1244 = vmatpush1.msra.mxu0 0.0
        %1245 = vmatprep.subr.mxu0 0.0
        %1246 = vmatpush1.msra.mxu0 0.0
        %1247 = vmatprep.subr.mxu0 0.0
        %1248 = vmatpush1.msra.mxu0 0.0
        %1249 = vmatprep.subr.mxu0 0.0
        %1250 = vmatpush1.msra.mxu0 0.0
        %1251 = vmatprep.subr.mxu0 0.0
        %1252 = vmatpush1.msra.mxu0 0.0
        %1253 = vmatprep.subr.mxu0 0.0
        %1254 = vmatpush1.msra.mxu0 0.0
        %1255 = vmatprep.subr.mxu0 0.0
        %1256 = vmatpush1.msra.mxu0 0.0
        %1257 = vmatprep.subr.mxu0 0.0
        %1258 = vmatpush1.msra.mxu0 0.0
        %1259 = vmatprep.subr.mxu0 0.0
        %1260 = vmatpush1.msra.mxu0 0.0
        %1261 = vmatprep.subr.mxu0 0.0
        %1262 = vmatpush1.msra.mxu0 0.0
        %1263 = vmatprep.subr.mxu0 0.0
        %1264 = vmatpush1.msra.mxu0 0.0
        %1265 = vmatprep.subr.mxu0 0.0
        %1266 = vmatpush1.msra.mxu0 0.0
        %1267 = vmatprep.subr.mxu0 0.0
        %1268 = vmatpush1.msra.mxu0 0.0
        %1269 = vmatprep.subr.mxu0 0.0
        %1270 = vmatpush1.msra.mxu0 0.0
        %1271 = vmatprep.subr.mxu0 0.0
        %1272 = vmatpush1.msra.mxu0 0.0
        %1273 = vmatprep.subr.mxu0 0.0
        %1274 = vmatpush1.msra.mxu0 0.0
        %1275 = vmatprep.mubr.f32.mxu0 0.0
        %1276 = vmatmul.mubr.f32.gmra.mrb[0].mxu0 %v1209
        %v1277 = vpop.f32.mrb[0].mxu0
        %v1278 = vadd.f32 0.0, %v1277
        %v1279 = vpop.f32.mrb[0].mxu0
        %1280 = vdwg.mxu0
        %v1282 = vsel %vm633, %v792, 0
        %1284 = vmatprep.subr.mxu0 0.0
        %1285 = vmatpush1.msra.mxu0 %v795
        %1286 = vmatprep.subr.mxu0 0.0
        %1287 = vmatpush1.msra.mxu0 0.0
        %1288 = vmatprep.subr.mxu0 0.0
        %1289 = vmatpush1.msra.mxu0 0.0
        %1290 = vmatprep.subr.mxu0 0.0
        %1291 = vmatpush1.msra.mxu0 0.0
        %1292 = vmatprep.subr.mxu0 0.0
        %1293 = vmatpush1.msra.mxu0 0.0
        %1294 = vmatprep.subr.mxu0 0.0
        %1295 = vmatpush1.msra.mxu0 0.0
        %1296 = vmatprep.subr.mxu0 0.0
        %1297 = vmatpush1.msra.mxu0 0.0
        %1298 = vmatprep.subr.mxu0 0.0
        %1299 = vmatpush1.msra.mxu0 0.0
        %1300 = vmatprep.subr.mxu0 0.0
        %1301 = vmatpush1.msra.mxu0 0.0
        %1302 = vmatprep.subr.mxu0 0.0
        %1303 = vmatpush1.msra.mxu0 0.0
        %1304 = vmatprep.subr.mxu0 0.0
        %1305 = vmatpush1.msra.mxu0 0.0
        %1306 = vmatprep.subr.mxu0 0.0
        %1307 = vmatpush1.msra.mxu0 0.0
        %1308 = vmatprep.subr.mxu0 0.0
        %1309 = vmatpush1.msra.mxu0 0.0
        %1310 = vmatprep.subr.mxu0 0.0
        %1311 = vmatpush1.msra.mxu0 0.0
        %1312 = vmatprep.subr.mxu0 0.0
        %1313 = vmatpush1.msra.mxu0 0.0
        %1314 = vmatprep.subr.mxu0 0.0
        %1315 = vmatpush1.msra.mxu0 0.0
        %1316 = vmatprep.subr.mxu0 0.0
        %1317 = vmatpush1.msra.mxu0 0.0
        %1318 = vmatprep.subr.mxu0 0.0
        %1319 = vmatpush1.msra.mxu0 0.0
        %1320 = vmatprep.subr.mxu0 0.0
        %1321 = vmatpush1.msra.mxu0 0.0
        %1322 = vmatprep.subr.mxu0 0.0
        %1323 = vmatpush1.msra.mxu0 0.0
        %1324 = vmatprep.subr.mxu0 0.0
        %1325 = vmatpush1.msra.mxu0 0.0
        %1326 = vmatprep.subr.mxu0 0.0
        %1327 = vmatpush1.msra.mxu0 0.0
        %1328 = vmatprep.subr.mxu0 0.0
        %1329 = vmatpush1.msra.mxu0 0.0
        %1330 = vmatprep.subr.mxu0 0.0
        %1331 = vmatpush1.msra.mxu0 0.0
        %1332 = vmatprep.subr.mxu0 0.0
        %1333 = vmatpush1.msra.mxu0 0.0
        %1334 = vmatprep.subr.mxu0 0.0
        %1335 = vmatpush1.msra.mxu0 0.0
        %1336 = vmatprep.subr.mxu0 0.0
        %1337 = vmatpush1.msra.mxu0 0.0
        %1338 = vmatprep.subr.mxu0 0.0
        %1339 = vmatpush1.msra.mxu0 0.0
        %1340 = vmatprep.subr.mxu0 0.0
        %1341 = vmatpush1.msra.mxu0 0.0
        %1342 = vmatprep.subr.mxu0 0.0
        %1343 = vmatpush1.msra.mxu0 0.0
        %1344 = vmatprep.subr.mxu0 0.0
        %1345 = vmatpush1.msra.mxu0 0.0
        %1346 = vmatprep.subr.mxu0 0.0
        %1347 = vmatpush1.msra.mxu0 0.0
        %1348 = vmatprep.mubr.f32.mxu0 0.0
        %1349 = vmatmul.mubr.f32.gmra.mrb[0].mxu0 %v1282
        %v1350 = vpop.f32.mrb[0].mxu0
        %v1351 = vadd.f32 %v1278, %v1350
        %v1352 = vpop.f32.mrb[0].mxu0
        %1353 = vdwg.mxu0
        %s1354 = scalar_lea.vmem %s3, 64
        %v1355 = vld [vmem:[%s1354] sm:$0xff]
        %v1356 = vld [vmem:[%s1354 + $0x8] sm:$0xff]
        %v1357 = vld [vmem:[%s1354 + $0x10] sm:$0xff]
        %v1358 = vld [vmem:[%s1354 + $0x18] sm:$0xff]
        %s1359 = scalar_lea.vmem %s4, 2
        %v1360 = vld [vmem:[%s1359] sm:$0x1]
        %v1362 = vlaneseq
        %v1363 = vshrl.u32 %v1362, 7
        %v1364 = vsub.s32 0, %v1363
        %v1365 = vrot.slane %v1360, %v1364
        %1367 = vmatprep.subr.mxu0 0.0
        %1368 = vmatpush1.msra.mxu0 %v1355
        %1369 = vmatprep.subr.mxu0 0.0
        %1370 = vmatpush1.msra.mxu0 %v1356
        %1371 = vmatprep.subr.mxu0 0.0
        %1372 = vmatpush1.msra.mxu0 %v1357
        %1373 = vmatprep.subr.mxu0 0.0
        %1374 = vmatpush1.msra.mxu0 %v1358
        %1375 = vmatprep.subr.mxu0 0.0
        %1376 = vmatpush1.msra.mxu0 0.0
        %1377 = vmatprep.subr.mxu0 0.0
        %1378 = vmatpush1.msra.mxu0 0.0
        %1379 = vmatprep.subr.mxu0 0.0
        %1380 = vmatpush1.msra.mxu0 0.0
        %1381 = vmatprep.subr.mxu0 0.0
        %1382 = vmatpush1.msra.mxu0 0.0
        %1383 = vmatprep.subr.mxu0 0.0
        %1384 = vmatpush1.msra.mxu0 0.0
        %1385 = vmatprep.subr.mxu0 0.0
        %1386 = vmatpush1.msra.mxu0 0.0
        %1387 = vmatprep.subr.mxu0 0.0
        %1388 = vmatpush1.msra.mxu0 0.0
        %1389 = vmatprep.subr.mxu0 0.0
        %1390 = vmatpush1.msra.mxu0 0.0
        %1391 = vmatprep.subr.mxu0 0.0
        %1392 = vmatpush1.msra.mxu0 0.0
        %1393 = vmatprep.subr.mxu0 0.0
        %1394 = vmatpush1.msra.mxu0 0.0
        %1395 = vmatprep.subr.mxu0 0.0
        %1396 = vmatpush1.msra.mxu0 0.0
        %1397 = vmatprep.subr.mxu0 0.0
        %1398 = vmatpush1.msra.mxu0 0.0
        %1399 = vmatprep.subr.mxu0 0.0
        %1400 = vmatpush1.msra.mxu0 0.0
        %1401 = vmatprep.subr.mxu0 0.0
        %1402 = vmatpush1.msra.mxu0 0.0
        %1403 = vmatprep.subr.mxu0 0.0
        %1404 = vmatpush1.msra.mxu0 0.0
        %1405 = vmatprep.subr.mxu0 0.0
        %1406 = vmatpush1.msra.mxu0 0.0
        %1407 = vmatprep.subr.mxu0 0.0
        %1408 = vmatpush1.msra.mxu0 0.0
        %1409 = vmatprep.subr.mxu0 0.0
        %1410 = vmatpush1.msra.mxu0 0.0
        %1411 = vmatprep.subr.mxu0 0.0
        %1412 = vmatpush1.msra.mxu0 0.0
        %1413 = vmatprep.subr.mxu0 0.0
        %1414 = vmatpush1.msra.mxu0 0.0
        %1415 = vmatprep.subr.mxu0 0.0
        %1416 = vmatpush1.msra.mxu0 0.0
        %1417 = vmatprep.subr.mxu0 0.0
        %1418 = vmatpush1.msra.mxu0 0.0
        %1419 = vmatprep.subr.mxu0 0.0
        %1420 = vmatpush1.msra.mxu0 0.0
        %1421 = vmatprep.subr.mxu0 0.0
        %1422 = vmatpush1.msra.mxu0 0.0
        %1423 = vmatprep.subr.mxu0 0.0
        %1424 = vmatpush1.msra.mxu0 0.0
        %1425 = vmatprep.subr.mxu0 0.0
        %1426 = vmatpush1.msra.mxu0 0.0
        %1427 = vmatprep.subr.mxu0 0.0
        %1428 = vmatpush1.msra.mxu0 0.0
        %1429 = vmatprep.subr.mxu0 0.0
        %1430 = vmatpush1.msra.mxu0 0.0
        %1431 = vmatprep.mubr.f32.mxu0 0.0
        %1432 = vmatmul.mubr.f32.gmra.mrb[0].mxu0 %v389
        %v1433 = vpop.f32.mrb[0].mxu0
        %v1434 = vadd.f32 %v1365, %v1433
        %v1435 = vpop.f32.mrb[0].mxu0
        %1436 = vdwg.mxu0
        %s1437 = scalar_lea.vmem %s3, 192
        %v1438 = vld [vmem:[%s1437] sm:$0xff]
        %v1439 = vld [vmem:[%s1437 + $0x8] sm:$0xff]
        %v1440 = vld [vmem:[%s1437 + $0x10] sm:$0xff]
        %v1441 = vld [vmem:[%s1437 + $0x18] sm:$0xff]
        %s1442 = scalar_lea.vmem %s4, 6
        %v1443 = vld [vmem:[%s1442] sm:$0x1]
        %v1445 = vlaneseq
        %v1446 = vshrl.u32 %v1445, 7
        %v1447 = vsub.s32 0, %v1446
        %v1448 = vrot.slane %v1443, %v1447
        %1450 = vmatprep.subr.mxu0 0.0
        %1451 = vmatpush1.msra.mxu0 %v1438
        %1452 = vmatprep.subr.mxu0 0.0
        %1453 = vmatpush1.msra.mxu0 %v1439
        %1454 = vmatprep.subr.mxu0 0.0
        %1455 = vmatpush1.msra.mxu0 %v1440
        %1456 = vmatprep.subr.mxu0 0.0
        %1457 = vmatpush1.msra.mxu0 %v1441
        %1458 = vmatprep.subr.mxu0 0.0
        %1459 = vmatpush1.msra.mxu0 0.0
        %1460 = vmatprep.subr.mxu0 0.0
        %1461 = vmatpush1.msra.mxu0 0.0
        %1462 = vmatprep.subr.mxu0 0.0
        %1463 = vmatpush1.msra.mxu0 0.0
        %1464 = vmatprep.subr.mxu0 0.0
        %1465 = vmatpush1.msra.mxu0 0.0
        %1466 = vmatprep.subr.mxu0 0.0
        %1467 = vmatpush1.msra.mxu0 0.0
        %1468 = vmatprep.subr.mxu0 0.0
        %1469 = vmatpush1.msra.mxu0 0.0
        %1470 = vmatprep.subr.mxu0 0.0
        %1471 = vmatpush1.msra.mxu0 0.0
        %1472 = vmatprep.subr.mxu0 0.0
        %1473 = vmatpush1.msra.mxu0 0.0
        %1474 = vmatprep.subr.mxu0 0.0
        %1475 = vmatpush1.msra.mxu0 0.0
        %1476 = vmatprep.subr.mxu0 0.0
        %1477 = vmatpush1.msra.mxu0 0.0
        %1478 = vmatprep.subr.mxu0 0.0
        %1479 = vmatpush1.msra.mxu0 0.0
        %1480 = vmatprep.subr.mxu0 0.0
        %1481 = vmatpush1.msra.mxu0 0.0
        %1482 = vmatprep.subr.mxu0 0.0
        %1483 = vmatpush1.msra.mxu0 0.0
        %1484 = vmatprep.subr.mxu0 0.0
        %1485 = vmatpush1.msra.mxu0 0.0
        %1486 = vmatprep.subr.mxu0 0.0
        %1487 = vmatpush1.msra.mxu0 0.0
        %1488 = vmatprep.subr.mxu0 0.0
        %1489 = vmatpush1.msra.mxu0 0.0
        %1490 = vmatprep.subr.mxu0 0.0
        %1491 = vmatpush1.msra.mxu0 0.0
        %1492 = vmatprep.subr.mxu0 0.0
        %1493 = vmatpush1.msra.mxu0 0.0
        %1494 = vmatprep.subr.mxu0 0.0
        %1495 = vmatpush1.msra.mxu0 0.0
        %1496 = vmatprep.subr.mxu0 0.0
        %1497 = vmatpush1.msra.mxu0 0.0
        %1498 = vmatprep.subr.mxu0 0.0
        %1499 = vmatpush1.msra.mxu0 0.0
        %1500 = vmatprep.subr.mxu0 0.0
        %1501 = vmatpush1.msra.mxu0 0.0
        %1502 = vmatprep.subr.mxu0 0.0
        %1503 = vmatpush1.msra.mxu0 0.0
        %1504 = vmatprep.subr.mxu0 0.0
        %1505 = vmatpush1.msra.mxu0 0.0
        %1506 = vmatprep.subr.mxu0 0.0
        %1507 = vmatpush1.msra.mxu0 0.0
        %1508 = vmatprep.subr.mxu0 0.0
        %1509 = vmatpush1.msra.mxu0 0.0
        %1510 = vmatprep.subr.mxu0 0.0
        %1511 = vmatpush1.msra.mxu0 0.0
        %1512 = vmatprep.subr.mxu0 0.0
        %1513 = vmatpush1.msra.mxu0 0.0
        %1514 = vmatprep.mubr.f32.mxu0 0.0
        %1515 = vmatmul.mubr.f32.gmra.mrb[0].mxu0 %v475
        %v1516 = vpop.f32.mrb[0].mxu0
        %v1517 = vadd.f32 %v1448, %v1516
        %v1518 = vpop.f32.mrb[0].mxu0
        %1519 = vdwg.mxu0
        %s1520 = scalar_lea.vmem %s3, 320
        %v1521 = vld [vmem:[%s1520] sm:$0xff]
        %v1522 = vld [vmem:[%s1520 + $0x8] sm:$0xff]
        %v1523 = vld [vmem:[%s1520 + $0x10] sm:$0xff]
        %v1524 = vld [vmem:[%s1520 + $0x18] sm:$0xff]
        %s1525 = scalar_lea.vmem %s4, 10
        %v1526 = vld [vmem:[%s1525] sm:$0x1]
        %v1528 = vlaneseq
        %v1529 = vshrl.u32 %v1528, 7
        %v1530 = vsub.s32 0, %v1529
        %v1531 = vrot.slane %v1526, %v1530
        %1533 = vmatprep.subr.mxu0 0.0
        %1534 = vmatpush1.msra.mxu0 %v1521
        %1535 = vmatprep.subr.mxu0 0.0
        %1536 = vmatpush1.msra.mxu0 %v1522
        %1537 = vmatprep.subr.mxu0 0.0
        %1538 = vmatpush1.msra.mxu0 %v1523
        %1539 = vmatprep.subr.mxu0 0.0
        %1540 = vmatpush1.msra.mxu0 %v1524
        %1541 = vmatprep.subr.mxu0 0.0
        %1542 = vmatpush1.msra.mxu0 0.0
        %1543 = vmatprep.subr.mxu0 0.0
        %1544 = vmatpush1.msra.mxu0 0.0
        %1545 = vmatprep.subr.mxu0 0.0
        %1546 = vmatpush1.msra.mxu0 0.0
        %1547 = vmatprep.subr.mxu0 0.0
        %1548 = vmatpush1.msra.mxu0 0.0
        %1549 = vmatprep.subr.mxu0 0.0
        %1550 = vmatpush1.msra.mxu0 0.0
        %1551 = vmatprep.subr.mxu0 0.0
        %1552 = vmatpush1.msra.mxu0 0.0
        %1553 = vmatprep.subr.mxu0 0.0
        %1554 = vmatpush1.msra.mxu0 0.0
        %1555 = vmatprep.subr.mxu0 0.0
        %1556 = vmatpush1.msra.mxu0 0.0
        %1557 = vmatprep.subr.mxu0 0.0
        %1558 = vmatpush1.msra.mxu0 0.0
        %1559 = vmatprep.subr.mxu0 0.0
        %1560 = vmatpush1.msra.mxu0 0.0
        %1561 = vmatprep.subr.mxu0 0.0
        %1562 = vmatpush1.msra.mxu0 0.0
        %1563 = vmatprep.subr.mxu0 0.0
        %1564 = vmatpush1.msra.mxu0 0.0
        %1565 = vmatprep.subr.mxu0 0.0
        %1566 = vmatpush1.msra.mxu0 0.0
        %1567 = vmatprep.subr.mxu0 0.0
        %1568 = vmatpush1.msra.mxu0 0.0
        %1569 = vmatprep.subr.mxu0 0.0
        %1570 = vmatpush1.msra.mxu0 0.0
        %1571 = vmatprep.subr.mxu0 0.0
        %1572 = vmatpush1.msra.mxu0 0.0
        %1573 = vmatprep.subr.mxu0 0.0
        %1574 = vmatpush1.msra.mxu0 0.0
        %1575 = vmatprep.subr.mxu0 0.0
        %1576 = vmatpush1.msra.mxu0 0.0
        %1577 = vmatprep.subr.mxu0 0.0
        %1578 = vmatpush1.msra.mxu0 0.0
        %1579 = vmatprep.subr.mxu0 0.0
        %1580 = vmatpush1.msra.mxu0 0.0
        %1581 = vmatprep.subr.mxu0 0.0
        %1582 = vmatpush1.msra.mxu0 0.0
        %1583 = vmatprep.subr.mxu0 0.0
        %1584 = vmatpush1.msra.mxu0 0.0
        %1585 = vmatprep.subr.mxu0 0.0
        %1586 = vmatpush1.msra.mxu0 0.0
        %1587 = vmatprep.subr.mxu0 0.0
        %1588 = vmatpush1.msra.mxu0 0.0
        %1589 = vmatprep.subr.mxu0 0.0
        %1590 = vmatpush1.msra.mxu0 0.0
        %1591 = vmatprep.subr.mxu0 0.0
        %1592 = vmatpush1.msra.mxu0 0.0
        %1593 = vmatprep.subr.mxu0 0.0
        %1594 = vmatpush1.msra.mxu0 0.0
        %1595 = vmatprep.subr.mxu0 0.0
        %1596 = vmatpush1.msra.mxu0 0.0
        %1597 = vmatprep.mubr.f32.mxu0 0.0
        %1598 = vmatmul.mubr.f32.gmra.mrb[0].mxu0 %v561
        %v1599 = vpop.f32.mrb[0].mxu0
        %v1600 = vadd.f32 %v1531, %v1599
        %v1601 = vpop.f32.mrb[0].mxu0
        %1602 = vdwg.mxu0
        %v1604 = vsel %vm633, %v1434, 0
        %v1607 = vsel %vm633, %v1517, 0
        %1609 = vmatprep.subr.mxu0 0.0
        %1610 = vmatpush1.xpose.msra.mxu0 %v1607
        %1611 = vmatprep.subr.mxu0 0.0
        %1612 = vmatpush1.xpose.msra.mxu0 0.0
        %1613 = vmatprep.subr.mxu0 0.0
        %1614 = vmatpush1.xpose.msra.mxu0 0.0
        %1615 = vmatprep.subr.mxu0 0.0
        %1616 = vmatpush1.xpose.msra.mxu0 0.0
        %1617 = vmatprep.subr.mxu0 0.0
        %1618 = vmatpush1.xpose.msra.mxu0 0.0
        %1619 = vmatprep.subr.mxu0 0.0
        %1620 = vmatpush1.xpose.msra.mxu0 0.0
        %1621 = vmatprep.subr.mxu0 0.0
        %1622 = vmatpush1.xpose.msra.mxu0 0.0
        %1623 = vmatprep.subr.mxu0 0.0
        %1624 = vmatpush1.xpose.msra.mxu0 0.0
        %1625 = vmatprep.subr.mxu0 0.0
        %1626 = vmatpush1.xpose.msra.mxu0 0.0
        %1627 = vmatprep.subr.mxu0 0.0
        %1628 = vmatpush1.xpose.msra.mxu0 0.0
        %1629 = vmatprep.subr.mxu0 0.0
        %1630 = vmatpush1.xpose.msra.mxu0 0.0
        %1631 = vmatprep.subr.mxu0 0.0
        %1632 = vmatpush1.xpose.msra.mxu0 0.0
        %1633 = vmatprep.subr.mxu0 0.0
        %1634 = vmatpush1.xpose.msra.mxu0 0.0
        %1635 = vmatprep.subr.mxu0 0.0
        %1636 = vmatpush1.xpose.msra.mxu0 0.0
        %1637 = vmatprep.subr.mxu0 0.0
        %1638 = vmatpush1.xpose.msra.mxu0 0.0
        %1639 = vmatprep.subr.mxu0 0.0
        %1640 = vmatpush1.xpose.msra.mxu0 0.0
        %1641 = vmatprep.subr.mxu0 0.0
        %1642 = vmatpush1.xpose.msra.mxu0 0.0
        %1643 = vmatprep.subr.mxu0 0.0
        %1644 = vmatpush1.xpose.msra.mxu0 0.0
        %1645 = vmatprep.subr.mxu0 0.0
        %1646 = vmatpush1.xpose.msra.mxu0 0.0
        %1647 = vmatprep.subr.mxu0 0.0
        %1648 = vmatpush1.xpose.msra.mxu0 0.0
        %1649 = vmatprep.subr.mxu0 0.0
        %1650 = vmatpush1.xpose.msra.mxu0 0.0
        %1651 = vmatprep.subr.mxu0 0.0
        %1652 = vmatpush1.xpose.msra.mxu0 0.0
        %1653 = vmatprep.subr.mxu0 0.0
        %1654 = vmatpush1.xpose.msra.mxu0 0.0
        %1655 = vmatprep.subr.mxu0 0.0
        %1656 = vmatpush1.xpose.msra.mxu0 0.0
        %1657 = vmatprep.subr.mxu0 0.0
        %1658 = vmatpush1.xpose.msra.mxu0 0.0
        %1659 = vmatprep.subr.mxu0 0.0
        %1660 = vmatpush1.xpose.msra.mxu0 0.0
        %1661 = vmatprep.subr.mxu0 0.0
        %1662 = vmatpush1.xpose.msra.mxu0 0.0
        %1663 = vmatprep.subr.mxu0 0.0
        %1664 = vmatpush1.xpose.msra.mxu0 0.0
        %1665 = vmatprep.subr.mxu0 0.0
        %1666 = vmatpush1.xpose.msra.mxu0 0.0
        %1667 = vmatprep.subr.mxu0 0.0
        %1668 = vmatpush1.xpose.msra.mxu0 0.0
        %1669 = vmatprep.subr.mxu0 0.0
        %1670 = vmatpush1.xpose.msra.mxu0 0.0
        %1671 = vmatprep.subr.mxu0 0.0
        %1672 = vmatpush1.xpose.msra.mxu0 0.0
        %1673 = vmatprep.mubr.f32.mxu0 0.0
        %1674 = vmatmul.mubr.f32.gmra.mrb[0].mxu0 %v1604
        %v1675 = vpop.f32.mrb[0].mxu0
        %v1676 = vadd.f32 0.0, %v1675
        %v1677 = vpop.f32.mrb[0].mxu0
        %1678 = vdwg.mxu0
        %v1679 = vsel %vm633, %v1676, -inf
        %1680 = vmax.xlane.f32.xlu0 %v1679
        %v1681 = vpop.xlane.xlu0 %1680
        %v1682 = vsub.f32 %v1676, %v1681
        %v1683 = vmul.f32 %v1682, 1.442695
        %v1684 = vpow.pop %v1683
        %v1685 = vsel %vm633, %v1684, 0.0
        %1686 = vadd.xlane.f32.xlu0 %v1685
        %v1687 = vpop.xlane.xlu0 %1686
        %v1688 = vrcp.pop %v1687
        %v1689 = vmul.f32 %v1684, %v1688
        %v1690 = vadd.f32 %v1132, %v1689
        %v1692 = vsel %vm633, %v1689, 0
        %1694 = vmatprep.subr.mxu0 0.0
        %1695 = vmatpush1.msra.mxu0 %v1600
        %1696 = vmatprep.subr.mxu0 0.0
        %1697 = vmatpush1.msra.mxu0 0.0
        %1698 = vmatprep.subr.mxu0 0.0
        %1699 = vmatpush1.msra.mxu0 0.0
        %1700 = vmatprep.subr.mxu0 0.0
        %1701 = vmatpush1.msra.mxu0 0.0
        %1702 = vmatprep.subr.mxu0 0.0
        %1703 = vmatpush1.msra.mxu0 0.0
        %1704 = vmatprep.subr.mxu0 0.0
        %1705 = vmatpush1.msra.mxu0 0.0
        %1706 = vmatprep.subr.mxu0 0.0
        %1707 = vmatpush1.msra.mxu0 0.0
        %1708 = vmatprep.subr.mxu0 0.0
        %1709 = vmatpush1.msra.mxu0 0.0
        %1710 = vmatprep.subr.mxu0 0.0
        %1711 = vmatpush1.msra.mxu0 0.0
        %1712 = vmatprep.subr.mxu0 0.0
        %1713 = vmatpush1.msra.mxu0 0.0
        %1714 = vmatprep.subr.mxu0 0.0
        %1715 = vmatpush1.msra.mxu0 0.0
        %1716 = vmatprep.subr.mxu0 0.0
        %1717 = vmatpush1.msra.mxu0 0.0
        %1718 = vmatprep.subr.mxu0 0.0
        %1719 = vmatpush1.msra.mxu0 0.0
        %1720 = vmatprep.subr.mxu0 0.0
        %1721 = vmatpush1.msra.mxu0 0.0
        %1722 = vmatprep.subr.mxu0 0.0
        %1723 = vmatpush1.msra.mxu0 0.0
        %1724 = vmatprep.subr.mxu0 0.0
        %1725 = vmatpush1.msra.mxu0 0.0
        %1726 = vmatprep.subr.mxu0 0.0
        %1727 = vmatpush1.msra.mxu0 0.0
        %1728 = vmatprep.subr.mxu0 0.0
        %1729 = vmatpush1.msra.mxu0 0.0
        %1730 = vmatprep.subr.mxu0 0.0
        %1731 = vmatpush1.msra.mxu0 0.0
        %1732 = vmatprep.subr.mxu0 0.0
        %1733 = vmatpush1.msra.mxu0 0.0
        %1734 = vmatprep.subr.mxu0 0.0
        %1735 = vmatpush1.msra.mxu0 0.0
        %1736 = vmatprep.subr.mxu0 0.0
        %1737 = vmatpush1.msra.mxu0 0.0
        %1738 = vmatprep.subr.mxu0 0.0
        %1739 = vmatpush1.msra.mxu0 0.0
        %1740 = vmatprep.subr.mxu0 0.0
        %1741 = vmatpush1.msra.mxu0 0.0
        %1742 = vmatprep.subr.mxu0 0.0
        %1743 = vmatpush1.msra.mxu0 0.0
        %1744 = vmatprep.subr.mxu0 0.0
        %1745 = vmatpush1.msra.mxu0 0.0
        %1746 = vmatprep.subr.mxu0 0.0
        %1747 = vmatpush1.msra.mxu0 0.0
        %1748 = vmatprep.subr.mxu0 0.0
        %1749 = vmatpush1.msra.mxu0 0.0
        %1750 = vmatprep.subr.mxu0 0.0
        %1751 = vmatpush1.msra.mxu0 0.0
        %1752 = vmatprep.subr.mxu0 0.0
        %1753 = vmatpush1.msra.mxu0 0.0
        %1754 = vmatprep.subr.mxu0 0.0
        %1755 = vmatpush1.msra.mxu0 0.0
        %1756 = vmatprep.subr.mxu0 0.0
        %1757 = vmatpush1.msra.mxu0 0.0
        %1758 = vmatprep.mubr.f32.mxu0 0.0
        %1759 = vmatmul.mubr.f32.gmra.mrb[0].mxu0 %v1692
        %v1760 = vpop.f32.mrb[0].mxu0
        %v1761 = vadd.f32 0.0, %v1760
        %v1762 = vpop.f32.mrb[0].mxu0
        %1763 = vdwg.mxu0
        %s1764 = scalar_lea.vmem %s5, 16
        %v1765 = vld [vmem:[%s1764] sm:$0xff]
        %v1767 = vsel %vm633, %v1761, 0
        %1769 = vmatprep.subr.mxu0 0.0
        %1770 = vmatpush1.msra.mxu0 %v1765
        %1771 = vmatprep.subr.mxu0 0.0
        %1772 = vmatpush1.msra.mxu0 0.0
        %1773 = vmatprep.subr.mxu0 0.0
        %1774 = vmatpush1.msra.mxu0 0.0
        %1775 = vmatprep.subr.mxu0 0.0
        %1776 = vmatpush1.msra.mxu0 0.0
        %1777 = vmatprep.subr.mxu0 0.0
        %1778 = vmatpush1.msra.mxu0 0.0
        %1779 = vmatprep.subr.mxu0 0.0
        %1780 = vmatpush1.msra.mxu0 0.0
        %1781 = vmatprep.subr.mxu0 0.0
        %1782 = vmatpush1.msra.mxu0 0.0
        %1783 = vmatprep.subr.mxu0 0.0
        %1784 = vmatpush1.msra.mxu0 0.0
        %1785 = vmatprep.subr.mxu0 0.0
        %1786 = vmatpush1.msra.mxu0 0.0
        %1787 = vmatprep.subr.mxu0 0.0
        %1788 = vmatpush1.msra.mxu0 0.0
        %1789 = vmatprep.subr.mxu0 0.0
        %1790 = vmatpush1.msra.mxu0 0.0
        %1791 = vmatprep.subr.mxu0 0.0
        %1792 = vmatpush1.msra.mxu0 0.0
        %1793 = vmatprep.subr.mxu0 0.0
        %1794 = vmatpush1.msra.mxu0 0.0
        %1795 = vmatprep.subr.mxu0 0.0
        %1796 = vmatpush1.msra.mxu0 0.0
        %1797 = vmatprep.subr.mxu0 0.0
        %1798 = vmatpush1.msra.mxu0 0.0
        %1799 = vmatprep.subr.mxu0 0.0
        %1800 = vmatpush1.msra.mxu0 0.0
        %1801 = vmatprep.subr.mxu0 0.0
        %1802 = vmatpush1.msra.mxu0 0.0
        %1803 = vmatprep.subr.mxu0 0.0
        %1804 = vmatpush1.msra.mxu0 0.0
        %1805 = vmatprep.subr.mxu0 0.0
        %1806 = vmatpush1.msra.mxu0 0.0
        %1807 = vmatprep.subr.mxu0 0.0
        %1808 = vmatpush1.msra.mxu0 0.0
        %1809 = vmatprep.subr.mxu0 0.0
        %1810 = vmatpush1.msra.mxu0 0.0
        %1811 = vmatprep.subr.mxu0 0.0
        %1812 = vmatpush1.msra.mxu0 0.0
        %1813 = vmatprep.subr.mxu0 0.0
        %1814 = vmatpush1.msra.mxu0 0.0
        %1815 = vmatprep.subr.mxu0 0.0
        %1816 = vmatpush1.msra.mxu0 0.0
        %1817 = vmatprep.subr.mxu0 0.0
        %1818 = vmatpush1.msra.mxu0 0.0
        %1819 = vmatprep.subr.mxu0 0.0
        %1820 = vmatpush1.msra.mxu0 0.0
        %1821 = vmatprep.subr.mxu0 0.0
        %1822 = vmatpush1.msra.mxu0 0.0
        %1823 = vmatprep.subr.mxu0 0.0
        %1824 = vmatpush1.msra.mxu0 0.0
        %1825 = vmatprep.subr.mxu0 0.0
        %1826 = vmatpush1.msra.mxu0 0.0
        %1827 = vmatprep.subr.mxu0 0.0
        %1828 = vmatpush1.msra.mxu0 0.0
        %1829 = vmatprep.subr.mxu0 0.0
        %1830 = vmatpush1.msra.mxu0 0.0
        %1831 = vmatprep.subr.mxu0 0.0
        %1832 = vmatpush1.msra.mxu0 0.0
        %1833 = vmatprep.mubr.f32.mxu0 0.0
        %1834 = vmatmul.mubr.f32.gmra.mrb[0].mxu0 %v1767
        %v1835 = vpop.f32.mrb[0].mxu0
        %v1836 = vadd.f32 0.0, %v1835
        %v1837 = vpop.f32.mrb[0].mxu0
        %1838 = vdwg.mxu0
        %v1839 = vadd.f32 %v1351, %v1836
        %s1840 = scalar_lea.vmem %s3, 96
        %v1841 = vld [vmem:[%s1840] sm:$0xff]
        %v1842 = vld [vmem:[%s1840 + $0x8] sm:$0xff]
        %v1843 = vld [vmem:[%s1840 + $0x10] sm:$0xff]
        %v1844 = vld [vmem:[%s1840 + $0x18] sm:$0xff]
        %s1845 = scalar_lea.vmem %s4, 3
        %v1846 = vld [vmem:[%s1845] sm:$0x1]
        %v1848 = vlaneseq
        %v1849 = vshrl.u32 %v1848, 7
        %v1850 = vsub.s32 0, %v1849
        %v1851 = vrot.slane %v1846, %v1850
        %1853 = vmatprep.subr.mxu0 0.0
        %1854 = vmatpush1.msra.mxu0 %v1841
        %1855 = vmatprep.subr.mxu0 0.0
        %1856 = vmatpush1.msra.mxu0 %v1842
        %1857 = vmatprep.subr.mxu0 0.0
        %1858 = vmatpush1.msra.mxu0 %v1843
        %1859 = vmatprep.subr.mxu0 0.0
        %1860 = vmatpush1.msra.mxu0 %v1844
        %1861 = vmatprep.subr.mxu0 0.0
        %1862 = vmatpush1.msra.mxu0 0.0
        %1863 = vmatprep.subr.mxu0 0.0
        %1864 = vmatpush1.msra.mxu0 0.0
        %1865 = vmatprep.subr.mxu0 0.0
        %1866 = vmatpush1.msra.mxu0 0.0
        %1867 = vmatprep.subr.mxu0 0.0
        %1868 = vmatpush1.msra.mxu0 0.0
        %1869 = vmatprep.subr.mxu0 0.0
        %1870 = vmatpush1.msra.mxu0 0.0
        %1871 = vmatprep.subr.mxu0 0.0
        %1872 = vmatpush1.msra.mxu0 0.0
        %1873 = vmatprep.subr.mxu0 0.0
        %1874 = vmatpush1.msra.mxu0 0.0
        %1875 = vmatprep.subr.mxu0 0.0
        %1876 = vmatpush1.msra.mxu0 0.0
        %1877 = vmatprep.subr.mxu0 0.0
        %1878 = vmatpush1.msra.mxu0 0.0
        %1879 = vmatprep.subr.mxu0 0.0
        %1880 = vmatpush1.msra.mxu0 0.0
        %1881 = vmatprep.subr.mxu0 0.0
        %1882 = vmatpush1.msra.mxu0 0.0
        %1883 = vmatprep.subr.mxu0 0.0
        %1884 = vmatpush1.msra.mxu0 0.0
        %1885 = vmatprep.subr.mxu0 0.0
        %1886 = vmatpush1.msra.mxu0 0.0
        %1887 = vmatprep.subr.mxu0 0.0
        %1888 = vmatpush1.msra.mxu0 0.0
        %1889 = vmatprep.subr.mxu0 0.0
        %1890 = vmatpush1.msra.mxu0 0.0
        %1891 = vmatprep.subr.mxu0 0.0
        %1892 = vmatpush1.msra.mxu0 0.0
        %1893 = vmatprep.subr.mxu0 0.0
        %1894 = vmatpush1.msra.mxu0 0.0
        %1895 = vmatprep.subr.mxu0 0.0
        %1896 = vmatpush1.msra.mxu0 0.0
        %1897 = vmatprep.subr.mxu0 0.0
        %1898 = vmatpush1.msra.mxu0 0.0
        %1899 = vmatprep.subr.mxu0 0.0
        %1900 = vmatpush1.msra.mxu0 0.0
        %1901 = vmatprep.subr.mxu0 0.0
        %1902 = vmatpush1.msra.mxu0 0.0
        %1903 = vmatprep.subr.mxu0 0.0
        %1904 = vmatpush1.msra.mxu0 0.0
        %1905 = vmatprep.subr.mxu0 0.0
        %1906 = vmatpush1.msra.mxu0 0.0
        %1907 = vmatprep.subr.mxu0 0.0
        %1908 = vmatpush1.msra.mxu0 0.0
        %1909 = vmatprep.subr.mxu0 0.0
        %1910 = vmatpush1.msra.mxu0 0.0
        %1911 = vmatprep.subr.mxu0 0.0
        %1912 = vmatpush1.msra.mxu0 0.0
        %1913 = vmatprep.subr.mxu0 0.0
        %1914 = vmatpush1.msra.mxu0 0.0
        %1915 = vmatprep.subr.mxu0 0.0
        %1916 = vmatpush1.msra.mxu0 0.0
        %1917 = vmatprep.mubr.f32.mxu0 0.0
        %1918 = vmatmul.mubr.f32.gmra.mrb[0].mxu0 %v389
        %v1919 = vpop.f32.mrb[0].mxu0
        %v1920 = vadd.f32 %v1851, %v1919
        %v1921 = vpop.f32.mrb[0].mxu0
        %1922 = vdwg.mxu0
        %s1923 = scalar_lea.vmem %s3, 224
        %v1924 = vld [vmem:[%s1923] sm:$0xff]
        %v1925 = vld [vmem:[%s1923 + $0x8] sm:$0xff]
        %v1926 = vld [vmem:[%s1923 + $0x10] sm:$0xff]
        %v1927 = vld [vmem:[%s1923 + $0x18] sm:$0xff]
        %s1928 = scalar_lea.vmem %s4, 7
        %v1929 = vld [vmem:[%s1928] sm:$0x1]
        %v1931 = vlaneseq
        %v1932 = vshrl.u32 %v1931, 7
        %v1933 = vsub.s32 0, %v1932
        %v1934 = vrot.slane %v1929, %v1933
        %1936 = vmatprep.subr.mxu0 0.0
        %1937 = vmatpush1.msra.mxu0 %v1924
        %1938 = vmatprep.subr.mxu0 0.0
        %1939 = vmatpush1.msra.mxu0 %v1925
        %1940 = vmatprep.subr.mxu0 0.0
        %1941 = vmatpush1.msra.mxu0 %v1926
        %1942 = vmatprep.subr.mxu0 0.0
        %1943 = vmatpush1.msra.mxu0 %v1927
        %1944 = vmatprep.subr.mxu0 0.0
        %1945 = vmatpush1.msra.mxu0 0.0
        %1946 = vmatprep.subr.mxu0 0.0
        %1947 = vmatpush1.msra.mxu0 0.0
        %1948 = vmatprep.subr.mxu0 0.0
        %1949 = vmatpush1.msra.mxu0 0.0
        %1950 = vmatprep.subr.mxu0 0.0
        %1951 = vmatpush1.msra.mxu0 0.0
        %1952 = vmatprep.subr.mxu0 0.0
        %1953 = vmatpush1.msra.mxu0 0.0
        %1954 = vmatprep.subr.mxu0 0.0
        %1955 = vmatpush1.msra.mxu0 0.0
        %1956 = vmatprep.subr.mxu0 0.0
        %1957 = vmatpush1.msra.mxu0 0.0
        %1958 = vmatprep.subr.mxu0 0.0
        %1959 = vmatpush1.msra.mxu0 0.0
        %1960 = vmatprep.subr.mxu0 0.0
        %1961 = vmatpush1.msra.mxu0 0.0
        %1962 = vmatprep.subr.mxu0 0.0
        %1963 = vmatpush1.msra.mxu0 0.0
        %1964 = vmatprep.subr.mxu0 0.0
        %1965 = vmatpush1.msra.mxu0 0.0
        %1966 = vmatprep.subr.mxu0 0.0
        %1967 = vmatpush1.msra.mxu0 0.0
        %1968 = vmatprep.subr.mxu0 0.0
        %1969 = vmatpush1.msra.mxu0 0.0
        %1970 = vmatprep.subr.mxu0 0.0
        %1971 = vmatpush1.msra.mxu0 0.0
        %1972 = vmatprep.subr.mxu0 0.0
        %1973 = vmatpush1.msra.mxu0 0.0
        %1974 = vmatprep.subr.mxu0 0.0
        %1975 = vmatpush1.msra.mxu0 0.0
        %1976 = vmatprep.subr.mxu0 0.0
        %1977 = vmatpush1.msra.mxu0 0.0
        %1978 = vmatprep.subr.mxu0 0.0
        %1979 = vmatpush1.msra.mxu0 0.0
        %1980 = vmatprep.subr.mxu0 0.0
        %1981 = vmatpush1.msra.mxu0 0.0
        %1982 = vmatprep.subr.mxu0 0.0
        %1983 = vmatpush1.msra.mxu0 0.0
        %1984 = vmatprep.subr.mxu0 0.0
        %1985 = vmatpush1.msra.mxu0 0.0
        %1986 = vmatprep.subr.mxu0 0.0
        %1987 = vmatpush1.msra.mxu0 0.0
        %1988 = vmatprep.subr.mxu0 0.0
        %1989 = vmatpush1.msra.mxu0 0.0
        %1990 = vmatprep.subr.mxu0 0.0
        %1991 = vmatpush1.msra.mxu0 0.0
        %1992 = vmatprep.subr.mxu0 0.0
        %1993 = vmatpush1.msra.mxu0 0.0
        %1994 = vmatprep.subr.mxu0 0.0
        %1995 = vmatpush1.msra.mxu0 0.0
        %1996 = vmatprep.subr.mxu0 0.0
        %1997 = vmatpush1.msra.mxu0 0.0
        %1998 = vmatprep.subr.mxu0 0.0
        %1999 = vmatpush1.msra.mxu0 0.0
        %2000 = vmatprep.mubr.f32.mxu0 0.0
        %2001 = vmatmul.mubr.f32.gmra.mrb[0].mxu0 %v475
        %v2002 = vpop.f32.mrb[0].mxu0
        %v2003 = vadd.f32 %v1934, %v2002
        %v2004 = vpop.f32.mrb[0].mxu0
        %2005 = vdwg.mxu0
        %s2006 = scalar_lea.vmem %s3, 352
        %v2007 = vld [vmem:[%s2006] sm:$0xff]
        %v2008 = vld [vmem:[%s2006 + $0x8] sm:$0xff]
        %v2009 = vld [vmem:[%s2006 + $0x10] sm:$0xff]
        %v2010 = vld [vmem:[%s2006 + $0x18] sm:$0xff]
        %s2011 = scalar_lea.vmem %s4, 11
        %v2012 = vld [vmem:[%s2011] sm:$0x1]
        %v2014 = vlaneseq
        %v2015 = vshrl.u32 %v2014, 7
        %v2016 = vsub.s32 0, %v2015
        %v2017 = vrot.slane %v2012, %v2016
        %2019 = vmatprep.subr.mxu0 0.0
        %2020 = vmatpush1.msra.mxu0 %v2007
        %2021 = vmatprep.subr.mxu0 0.0
        %2022 = vmatpush1.msra.mxu0 %v2008
        %2023 = vmatprep.subr.mxu0 0.0
        %2024 = vmatpush1.msra.mxu0 %v2009
        %2025 = vmatprep.subr.mxu0 0.0
        %2026 = vmatpush1.msra.mxu0 %v2010
        %2027 = vmatprep.subr.mxu0 0.0
        %2028 = vmatpush1.msra.mxu0 0.0
        %2029 = vmatprep.subr.mxu0 0.0
        %2030 = vmatpush1.msra.mxu0 0.0
        %2031 = vmatprep.subr.mxu0 0.0
        %2032 = vmatpush1.msra.mxu0 0.0
        %2033 = vmatprep.subr.mxu0 0.0
        %2034 = vmatpush1.msra.mxu0 0.0
        %2035 = vmatprep.subr.mxu0 0.0
        %2036 = vmatpush1.msra.mxu0 0.0
        %2037 = vmatprep.subr.mxu0 0.0
        %2038 = vmatpush1.msra.mxu0 0.0
        %2039 = vmatprep.subr.mxu0 0.0
        %2040 = vmatpush1.msra.mxu0 0.0
        %2041 = vmatprep.subr.mxu0 0.0
        %2042 = vmatpush1.msra.mxu0 0.0
        %2043 = vmatprep.subr.mxu0 0.0
        %2044 = vmatpush1.msra.mxu0 0.0
        %2045 = vmatprep.subr.mxu0 0.0
        %2046 = vmatpush1.msra.mxu0 0.0
        %2047 = vmatprep.subr.mxu0 0.0
        %2048 = vmatpush1.msra.mxu0 0.0
        %2049 = vmatprep.subr.mxu0 0.0
        %2050 = vmatpush1.msra.mxu0 0.0
        %2051 = vmatprep.subr.mxu0 0.0
        %2052 = vmatpush1.msra.mxu0 0.0
        %2053 = vmatprep.subr.mxu0 0.0
        %2054 = vmatpush1.msra.mxu0 0.0
        %2055 = vmatprep.subr.mxu0 0.0
        %2056 = vmatpush1.msra.mxu0 0.0
        %2057 = vmatprep.subr.mxu0 0.0
        %2058 = vmatpush1.msra.mxu0 0.0
        %2059 = vmatprep.subr.mxu0 0.0
        %2060 = vmatpush1.msra.mxu0 0.0
        %2061 = vmatprep.subr.mxu0 0.0
        %2062 = vmatpush1.msra.mxu0 0.0
        %2063 = vmatprep.subr.mxu0 0.0
        %2064 = vmatpush1.msra.mxu0 0.0
        %2065 = vmatprep.subr.mxu0 0.0
        %2066 = vmatpush1.msra.mxu0 0.0
        %2067 = vmatprep.subr.mxu0 0.0
        %2068 = vmatpush1.msra.mxu0 0.0
        %2069 = vmatprep.subr.mxu0 0.0
        %2070 = vmatpush1.msra.mxu0 0.0
        %2071 = vmatprep.subr.mxu0 0.0
        %2072 = vmatpush1.msra.mxu0 0.0
        %2073 = vmatprep.subr.mxu0 0.0
        %2074 = vmatpush1.msra.mxu0 0.0
        %2075 = vmatprep.subr.mxu0 0.0
        %2076 = vmatpush1.msra.mxu0 0.0
        %2077 = vmatprep.subr.mxu0 0.0
        %2078 = vmatpush1.msra.mxu0 0.0
        %2079 = vmatprep.subr.mxu0 0.0
        %2080 = vmatpush1.msra.mxu0 0.0
        %2081 = vmatprep.subr.mxu0 0.0
        %2082 = vmatpush1.msra.mxu0 0.0
        %2083 = vmatprep.mubr.f32.mxu0 0.0
        %2084 = vmatmul.mubr.f32.gmra.mrb[0].mxu0 %v561
        %v2085 = vpop.f32.mrb[0].mxu0
        %v2086 = vadd.f32 %v2017, %v2085
        %v2087 = vpop.f32.mrb[0].mxu0
        %2088 = vdwg.mxu0
        %v2090 = vsel %vm633, %v1920, 0
        %v2093 = vsel %vm633, %v2003, 0
        %2095 = vmatprep.subr.mxu0 0.0
        %2096 = vmatpush1.xpose.msra.mxu0 %v2093
        %2097 = vmatprep.subr.mxu0 0.0
        %2098 = vmatpush1.xpose.msra.mxu0 0.0
        %2099 = vmatprep.subr.mxu0 0.0
        %2100 = vmatpush1.xpose.msra.mxu0 0.0
        %2101 = vmatprep.subr.mxu0 0.0
        %2102 = vmatpush1.xpose.msra.mxu0 0.0
        %2103 = vmatprep.subr.mxu0 0.0
        %2104 = vmatpush1.xpose.msra.mxu0 0.0
        %2105 = vmatprep.subr.mxu0 0.0
        %2106 = vmatpush1.xpose.msra.mxu0 0.0
        %2107 = vmatprep.subr.mxu0 0.0
        %2108 = vmatpush1.xpose.msra.mxu0 0.0
        %2109 = vmatprep.subr.mxu0 0.0
        %2110 = vmatpush1.xpose.msra.mxu0 0.0
        %2111 = vmatprep.subr.mxu0 0.0
        %2112 = vmatpush1.xpose.msra.mxu0 0.0
        %2113 = vmatprep.subr.mxu0 0.0
        %2114 = vmatpush1.xpose.msra.mxu0 0.0
        %2115 = vmatprep.subr.mxu0 0.0
        %2116 = vmatpush1.xpose.msra.mxu0 0.0
        %2117 = vmatprep.subr.mxu0 0.0
        %2118 = vmatpush1.xpose.msra.mxu0 0.0
        %2119 = vmatprep.subr.mxu0 0.0
        %2120 = vmatpush1.xpose.msra.mxu0 0.0
        %2121 = vmatprep.subr.mxu0 0.0
        %2122 = vmatpush1.xpose.msra.mxu0 0.0
        %2123 = vmatprep.subr.mxu0 0.0
        %2124 = vmatpush1.xpose.msra.mxu0 0.0
        %2125 = vmatprep.subr.mxu0 0.0
        %2126 = vmatpush1.xpose.msra.mxu0 0.0
        %2127 = vmatprep.subr.mxu0 0.0
        %2128 = vmatpush1.xpose.msra.mxu0 0.0
        %2129 = vmatprep.subr.mxu0 0.0
        %2130 = vmatpush1.xpose.msra.mxu0 0.0
        %2131 = vmatprep.subr.mxu0 0.0
        %2132 = vmatpush1.xpose.msra.mxu0 0.0
        %2133 = vmatprep.subr.mxu0 0.0
        %2134 = vmatpush1.xpose.msra.mxu0 0.0
        %2135 = vmatprep.subr.mxu0 0.0
        %2136 = vmatpush1.xpose.msra.mxu0 0.0
        %2137 = vmatprep.subr.mxu0 0.0
        %2138 = vmatpush1.xpose.msra.mxu0 0.0
        %2139 = vmatprep.subr.mxu0 0.0
        %2140 = vmatpush1.xpose.msra.mxu0 0.0
        %2141 = vmatprep.subr.mxu0 0.0
        %2142 = vmatpush1.xpose.msra.mxu0 0.0
        %2143 = vmatprep.subr.mxu0 0.0
        %2144 = vmatpush1.xpose.msra.mxu0 0.0
        %2145 = vmatprep.subr.mxu0 0.0
        %2146 = vmatpush1.xpose.msra.mxu0 0.0
        %2147 = vmatprep.subr.mxu0 0.0
        %2148 = vmatpush1.xpose.msra.mxu0 0.0
        %2149 = vmatprep.subr.mxu0 0.0
        %2150 = vmatpush1.xpose.msra.mxu0 0.0
        %2151 = vmatprep.subr.mxu0 0.0
        %2152 = vmatpush1.xpose.msra.mxu0 0.0
        %2153 = vmatprep.subr.mxu0 0.0
        %2154 = vmatpush1.xpose.msra.mxu0 0.0
        %2155 = vmatprep.subr.mxu0 0.0
        %2156 = vmatpush1.xpose.msra.mxu0 0.0
        %2157 = vmatprep.subr.mxu0 0.0
        %2158 = vmatpush1.xpose.msra.mxu0 0.0
        %2159 = vmatprep.mubr.f32.mxu0 0.0
        %2160 = vmatmul.mubr.f32.gmra.mrb[0].mxu0 %v2090
        %v2161 = vpop.f32.mrb[0].mxu0
        %v2162 = vadd.f32 0.0, %v2161
        %v2163 = vpop.f32.mrb[0].mxu0
        %2164 = vdwg.mxu0
        %v2165 = vsel %vm633, %v2162, -inf
        %2166 = vmax.xlane.f32.xlu0 %v2165
        %v2167 = vpop.xlane.xlu0 %2166
        %v2168 = vsub.f32 %v2162, %v2167
        %v2169 = vmul.f32 %v2168, 1.442695
        %v2170 = vpow.pop %v2169
        %v2171 = vsel %vm633, %v2170, 0.0
        %2172 = vadd.xlane.f32.xlu0 %v2171
        %v2173 = vpop.xlane.xlu0 %2172
        %v2174 = vrcp.pop %v2173
        %v2175 = vmul.f32 %v2170, %v2174
        %v2176 = vadd.f32 %v1690, %v2175
        %v2178 = vsel %vm633, %v2175, 0
        %2180 = vmatprep.subr.mxu0 0.0
        %2181 = vmatpush1.msra.mxu0 %v2086
        %2182 = vmatprep.subr.mxu0 0.0
        %2183 = vmatpush1.msra.mxu0 0.0
        %2184 = vmatprep.subr.mxu0 0.0
        %2185 = vmatpush1.msra.mxu0 0.0
        %2186 = vmatprep.subr.mxu0 0.0
        %2187 = vmatpush1.msra.mxu0 0.0
        %2188 = vmatprep.subr.mxu0 0.0
        %2189 = vmatpush1.msra.mxu0 0.0
        %2190 = vmatprep.subr.mxu0 0.0
        %2191 = vmatpush1.msra.mxu0 0.0
        %2192 = vmatprep.subr.mxu0 0.0
        %2193 = vmatpush1.msra.mxu0 0.0
        %2194 = vmatprep.subr.mxu0 0.0
        %2195 = vmatpush1.msra.mxu0 0.0
        %2196 = vmatprep.subr.mxu0 0.0
        %2197 = vmatpush1.msra.mxu0 0.0
        %2198 = vmatprep.subr.mxu0 0.0
        %2199 = vmatpush1.msra.mxu0 0.0
        %2200 = vmatprep.subr.mxu0 0.0
        %2201 = vmatpush1.msra.mxu0 0.0
        %2202 = vmatprep.subr.mxu0 0.0
        %2203 = vmatpush1.msra.mxu0 0.0
        %2204 = vmatprep.subr.mxu0 0.0
        %2205 = vmatpush1.msra.mxu0 0.0
        %2206 = vmatprep.subr.mxu0 0.0
        %2207 = vmatpush1.msra.mxu0 0.0
        %2208 = vmatprep.subr.mxu0 0.0
        %2209 = vmatpush1.msra.mxu0 0.0
        %2210 = vmatprep.subr.mxu0 0.0
        %2211 = vmatpush1.msra.mxu0 0.0
        %2212 = vmatprep.subr.mxu0 0.0
        %2213 = vmatpush1.msra.mxu0 0.0
        %2214 = vmatprep.subr.mxu0 0.0
        %2215 = vmatpush1.msra.mxu0 0.0
        %2216 = vmatprep.subr.mxu0 0.0
        %2217 = vmatpush1.msra.mxu0 0.0
        %2218 = vmatprep.subr.mxu0 0.0
        %2219 = vmatpush1.msra.mxu0 0.0
        %2220 = vmatprep.subr.mxu0 0.0
        %2221 = vmatpush1.msra.mxu0 0.0
        %2222 = vmatprep.subr.mxu0 0.0
        %2223 = vmatpush1.msra.mxu0 0.0
        %2224 = vmatprep.subr.mxu0 0.0
        %2225 = vmatpush1.msra.mxu0 0.0
        %2226 = vmatprep.subr.mxu0 0.0
        %2227 = vmatpush1.msra.mxu0 0.0
        %2228 = vmatprep.subr.mxu0 0.0
        %2229 = vmatpush1.msra.mxu0 0.0
        %2230 = vmatprep.subr.mxu0 0.0
        %2231 = vmatpush1.msra.mxu0 0.0
        %2232 = vmatprep.subr.mxu0 0.0
        %2233 = vmatpush1.msra.mxu0 0.0
        %2234 = vmatprep.subr.mxu0 0.0
        %2235 = vmatpush1.msra.mxu0 0.0
        %2236 = vmatprep.subr.mxu0 0.0
        %2237 = vmatpush1.msra.mxu0 0.0
        %2238 = vmatprep.subr.mxu0 0.0
        %2239 = vmatpush1.msra.mxu0 0.0
        %2240 = vmatprep.subr.mxu0 0.0
        %2241 = vmatpush1.msra.mxu0 0.0
        %2242 = vmatprep.subr.mxu0 0.0
        %2243 = vmatpush1.msra.mxu0 0.0
        %2244 = vmatprep.mubr.f32.mxu0 0.0
        %2245 = vmatmul.mubr.f32.gmra.mrb[0].mxu0 %v2178
        %v2246 = vpop.f32.mrb[0].mxu0
        %v2247 = vadd.f32 0.0, %v2246
        %v2248 = vpop.f32.mrb[0].mxu0
        %2249 = vdwg.mxu0
        %s2250 = scalar_lea.vmem %s5, 24
        %v2251 = vld [vmem:[%s2250] sm:$0xff]
        %v2253 = vsel %vm633, %v2247, 0
        %2255 = vmatprep.subr.mxu0 0.0
        %2256 = vmatpush1.msra.mxu0 %v2251
        %2257 = vmatprep.subr.mxu0 0.0
        %2258 = vmatpush1.msra.mxu0 0.0
        %2259 = vmatprep.subr.mxu0 0.0
        %2260 = vmatpush1.msra.mxu0 0.0
        %2261 = vmatprep.subr.mxu0 0.0
        %2262 = vmatpush1.msra.mxu0 0.0
        %2263 = vmatprep.subr.mxu0 0.0
        %2264 = vmatpush1.msra.mxu0 0.0
        %2265 = vmatprep.subr.mxu0 0.0
        %2266 = vmatpush1.msra.mxu0 0.0
        %2267 = vmatprep.subr.mxu0 0.0
        %2268 = vmatpush1.msra.mxu0 0.0
        %2269 = vmatprep.subr.mxu0 0.0
        %2270 = vmatpush1.msra.mxu0 0.0
        %2271 = vmatprep.subr.mxu0 0.0
        %2272 = vmatpush1.msra.mxu0 0.0
        %2273 = vmatprep.subr.mxu0 0.0
        %2274 = vmatpush1.msra.mxu0 0.0
        %2275 = vmatprep.subr.mxu0 0.0
        %2276 = vmatpush1.msra.mxu0 0.0
        %2277 = vmatprep.subr.mxu0 0.0
        %2278 = vmatpush1.msra.mxu0 0.0
        %2279 = vmatprep.subr.mxu0 0.0
        %2280 = vmatpush1.msra.mxu0 0.0
        %2281 = vmatprep.subr.mxu0 0.0
        %2282 = vmatpush1.msra.mxu0 0.0
        %2283 = vmatprep.subr.mxu0 0.0
        %2284 = vmatpush1.msra.mxu0 0.0
        %2285 = vmatprep.subr.mxu0 0.0
        %2286 = vmatpush1.msra.mxu0 0.0
        %2287 = vmatprep.subr.mxu0 0.0
        %2288 = vmatpush1.msra.mxu0 0.0
        %2289 = vmatprep.subr.mxu0 0.0
        %2290 = vmatpush1.msra.mxu0 0.0
        %2291 = vmatprep.subr.mxu0 0.0
        %2292 = vmatpush1.msra.mxu0 0.0
        %2293 = vmatprep.subr.mxu0 0.0
        %2294 = vmatpush1.msra.mxu0 0.0
        %2295 = vmatprep.subr.mxu0 0.0
        %2296 = vmatpush1.msra.mxu0 0.0
        %2297 = vmatprep.subr.mxu0 0.0
        %2298 = vmatpush1.msra.mxu0 0.0
        %2299 = vmatprep.subr.mxu0 0.0
        %2300 = vmatpush1.msra.mxu0 0.0
        %2301 = vmatprep.subr.mxu0 0.0
        %2302 = vmatpush1.msra.mxu0 0.0
        %2303 = vmatprep.subr.mxu0 0.0
        %2304 = vmatpush1.msra.mxu0 0.0
        %2305 = vmatprep.subr.mxu0 0.0
        %2306 = vmatpush1.msra.mxu0 0.0
        %2307 = vmatprep.subr.mxu0 0.0
        %2308 = vmatpush1.msra.mxu0 0.0
        %2309 = vmatprep.subr.mxu0 0.0
        %2310 = vmatpush1.msra.mxu0 0.0
        %2311 = vmatprep.subr.mxu0 0.0
        %2312 = vmatpush1.msra.mxu0 0.0
        %2313 = vmatprep.subr.mxu0 0.0
        %2314 = vmatpush1.msra.mxu0 0.0
        %2315 = vmatprep.subr.mxu0 0.0
        %2316 = vmatpush1.msra.mxu0 0.0
        %2317 = vmatprep.subr.mxu0 0.0
        %2318 = vmatpush1.msra.mxu0 0.0
        %2319 = vmatprep.mubr.f32.mxu0 0.0
        %2320 = vmatmul.mubr.f32.gmra.mrb[0].mxu0 %v2253
        %v2321 = vpop.f32.mrb[0].mxu0
        %v2322 = vadd.f32 0.0, %v2321
        %v2323 = vpop.f32.mrb[0].mxu0
        %2324 = vdwg.mxu0
        %v2325 = vadd.f32 %v1839, %v2322
        %v2326 = vld [vmem:[%s6] sm:$0x1]
        %v2328 = vlaneseq
        %v2329 = vshrl.u32 %v2328, 7
        %v2330 = vsub.s32 0, %v2329
        %v2331 = vrot.slane %v2326, %v2330
        %v2333 = vadd.f32 %v2325, %v2331
        %2334 = vst.msk [vmem:[%s350] sm:$0xff] %vm387, %v2333
        %2335 = vst.msk [vmem:[%s357] sm:$0xff] %vm633, %v2176
        %s2336 = sand.u32 %s212, 1
        %s2337 = scalar_lea.sflag [#allocation3], %s2336
        %s2338 = sand.u32 %s212, 1
        %s2339 = smul.addr %s2338, 8
        %s2340 = scalar_lea.vmem [#allocation2], %s2339
        %s2341 = sand.u32 %s240, 1
        %s2342 = scalar_lea.sflag [#allocation5], %s2341
        %s2343 = sand.u32 %s240, 1
        %s2344 = smul.addr %s2343, 8
        %s2345 = scalar_lea.vmem [#allocation4], %s2344
        // Predicated region
        $region49: #{tpu_custom_call.1} parent=47 // pred_check
          %p2346 = pneg %p222
        $region50: #{tpu_custom_call.1} parent=47 // pred_check_branch
          %2348 = sbr.rel (%p2346) target = $region52
        $region51: #{tpu_custom_call.1} parent=47 // pred_region
          %s2350 = ssub.s32 128, 128
          %2351 = vsyncadd %s2337, %s2350
          %s2352 = sadd.s32 %s31, %s30
          %s2353 = smul.addr %s2352, 128
          %s2354 = scalar_lea.hbm %s7, %s2353
          %s2356 = sshll.u32 %s2340, 4
          %s2357 = int_to_ptr.vmem [resolvable:$true] %s2356
          %2359 = dma.vmem_to_hbm [thread:$0]  %s2357, 128, %s2354, %s2337
        $region52: #{tpu_custom_call.1} parent=47 // pred_fallthru
          _
        // Predicated region
        $region53: #{tpu_custom_call.1} parent=47 // pred_check
          %p2360 = pneg %p250
        $region54: #{tpu_custom_call.1} parent=47 // pred_check_branch
          %2362 = sbr.rel (%p2360) target = $region56
        $region55: #{tpu_custom_call.1} parent=47 // pred_region
          %s2364 = ssub.s32 128, 128
          %2365 = vsyncadd %s2342, %s2364
          %s2366 = sadd.s32 %s31, %s30
          %s2367 = smul.addr %s2366, 128
          %s2368 = scalar_lea.hbm %s8, %s2367
          %s2370 = sshll.u32 %s2345, 4
          %s2371 = int_to_ptr.vmem [resolvable:$true] %s2370
          %2373 = dma.vmem_to_hbm [thread:$0]  %s2371, 128, %s2368, %s2342
        $region56: #{tpu_custom_call.1} parent=47 // pred_fallthru
          _
      $region48: #{tpu_custom_call.1} parent=5 // pred_fallthru
        _
      %p2374 = scmp.le.s32.totalorder 2, %s21
      // Predicated region
      $region57: #{tpu_custom_call.1} parent=5 // pred_check
        %p2375 = pneg %p2374
      $region58: #{tpu_custom_call.1} parent=5 // pred_check_branch
        %2377 = sbr.rel (%p2375) target = $region60
      $region59: #{tpu_custom_call.1} parent=5 // pred_region
        %s2378 = ssub.s32 %s21, 2
        // Predicated region
        $region61: #{tpu_custom_call.1} parent=59 // pred_check
          %p2379 = pneg %p228
        $region62: #{tpu_custom_call.1} parent=59 // pred_check_branch
          %2381 = sbr.rel (%p2379) target = $region64
        $region63: #{tpu_custom_call.1} parent=59 // pred_region
          %s2382 = sand.u32 %s213, 1
          %s2383 = scalar_lea.sflag [#allocation3], %s2382
          %s2384 = sand.u32 %s213, 1
          %s2385 = smul.addr %s2384, 8
          %s2386 = scalar_lea.vmem [#allocation2], %s2385
          %2387 = dma.done %s2383, 128
        $region64: #{tpu_custom_call.1} parent=59 // pred_fallthru
          _
        // Predicated region
        $region65: #{tpu_custom_call.1} parent=59 // pred_check
          %p2388 = pneg %p256
        $region66: #{tpu_custom_call.1} parent=59 // pred_check_branch
          %2390 = sbr.rel (%p2388) target = $region68
        $region67: #{tpu_custom_call.1} parent=59 // pred_region
          %s2391 = sand.u32 %s241, 1
          %s2392 = scalar_lea.sflag [#allocation5], %s2391
          %s2393 = sand.u32 %s241, 1
          %s2394 = smul.addr %s2393, 8
          %s2395 = scalar_lea.vmem [#allocation4], %s2394
          %2396 = dma.done %s2392, 128
        $region68: #{tpu_custom_call.1} parent=59 // pred_fallthru
          _
      $region60: #{tpu_custom_call.1} parent=5 // pred_fallthru
        _
    $region6: #{tpu_custom_call.1} parent=1 // loop_footer
      %s25 = sadd.s32 1, %s21
    $region7: #{tpu_custom_call.1} parent=1 // loop_footer_branch
      %20 = sbr.rel target = $region3
    $region8: #{tpu_custom_call.1} parent=1 // loop_exit
      _
    %2397 = vsyncpa [#allocation3], 1
    %s2398 = scalar_lea.sflag [#allocation3], 1
    %2399 = vsyncpa %s2398, 1
    %2400 = vsyncpa [#allocation5], 1
    %s2401 = scalar_lea.sflag [#allocation5], 1
    %2402 = vsyncpa %s2401, 1

</llo_original>
